<compile_context>
chip_gen: v6e
topology: v6e:2x2x1
jax: 0.10.0
libtpu: 0.0.40
codegen_flags: <defaults>
</compile_context>

<pallas_src>
import functools

import jax
import jax.numpy as jnp
from jax.experimental import pallas as pl
from jax.experimental.pallas import tpu as pltpu


# ---------------------------------------------------------------------------
# helpers
# ---------------------------------------------------------------------------
def _round_up(x, m):
    return ((x + m - 1) // m) * m


def _pad2(a, shape):
    return jnp.pad(a, [(0, t - s) for s, t in zip(a.shape, shape)])


def _pick_tile(dim, pref):
    """Largest of (512, 256, 128) that divides `dim` and is <= pref."""
    for t in (512, 256, 128):
        if t <= pref and dim % t == 0:
            return t
    return 128


def build_normalized_adjacency(edge_index, num_nodes):
    """Dense D^-1/2 (A + I) D^-1/2, matching PyG gcn_norm (add_self_loops=True)."""
    src, dst = edge_index
    loop = jnp.arange(num_nodes, dtype=src.dtype)
    src = jnp.concatenate([src, loop])
    dst = jnp.concatenate([dst, loop])
    deg = jnp.zeros((num_nodes,), jnp.float32).at[dst].add(1.0)
    dinv = jax.lax.rsqrt(deg)                     # deg >= 1 because of self loops
    norm = dinv[src] * dinv[dst]
    # message flows source -> target: out[dst] += norm * xW[src]
    a_hat = jnp.zeros((num_nodes, num_nodes), jnp.float32).at[dst, src].add(norm)
    return a_hat


# ---------------------------------------------------------------------------
# Kernel 1: generic tiled matmul   out = act(A @ B [+ bias])
# ---------------------------------------------------------------------------
def matmul_bias_act_kernel(a_ref, b_ref, bias_ref, o_ref, acc_ref, *,
                           add_bias, apply_relu):
    k = pl.program_id(1)

    @pl.when(k == 0)
    def _():
        acc_ref[...] = jnp.zeros_like(acc_ref)

    # (tm, tk) @ (tk, Cout) on the MXU in bf16, f32 accumulate across k.
    acc_ref[...] += jnp.dot(a_ref[...], b_ref[...],
                            preferred_element_type=jnp.float32)

    @pl.when(k == pl.num_programs(1) - 1)
    def _():
        h = acc_ref[...]
        if add_bias:
            h = h + bias_ref[...]                 # (1, Cout) broadcast, f32 VPU
        if apply_relu:
            h = jnp.maximum(h, 0.0)
        o_ref[...] = h.astype(o_ref.dtype)


def matmul_bias_act(a, b, bias=None, *, apply_relu=False,
                    out_dtype=jnp.bfloat16, tm=128, tk=128):
    m, kd = int(a.shape[0]), int(a.shape[1])
    n = int(b.shape[1])
    add_bias = bias is not None
    if bias is None:
        bias = jnp.zeros((1, n), jnp.float32)

    grid = (m // tm, kd // tk)
    flops = 2 * m * kd * n
    bytes_accessed = int(a.size * 2 + grid[0] * b.size * 2 + bias.size * 4
                         + m * n * jnp.dtype(out_dtype).itemsize)

    return pl.pallas_call(
        functools.partial(matmul_bias_act_kernel,
                          add_bias=add_bias, apply_relu=apply_relu),
        out_shape=jax.ShapeDtypeStruct((m, n), out_dtype),
        grid_spec=pltpu.PrefetchScalarGridSpec(
            num_scalar_prefetch=0,
            grid=grid,
            in_specs=[
                pl.BlockSpec((tm, tk), lambda i, k: (i, k)),    # A tile
                pl.BlockSpec((tk, n), lambda i, k: (k, 0)),     # B row tile
                pl.BlockSpec((1, n), lambda i, k: (0, 0)),      # bias (resident)
            ],
            out_specs=pl.BlockSpec((tm, n), lambda i, k: (i, 0)),
            scratch_shapes=[pltpu.VMEM((tm, n), jnp.float32)],
        ),
        compiler_params=pltpu.CompilerParams(
            dimension_semantics=("parallel", "arbitrary"),
            vmem_limit_bytes=32 * 1024 * 1024,
        ),
        cost_estimate=pl.CostEstimate(flops=flops, transcendentals=0,
                                      bytes_accessed=bytes_accessed),
    )(a, b, bias)


# ---------------------------------------------------------------------------
# Kernel 2: edge decoder      score[e] = sum_c z[src[e], c] * z[dst[e], c]
# ---------------------------------------------------------------------------
def decode_kernel(src_ref, dst_ref, z_ref, o_ref, *, num_edges):
    lanes = o_ref.shape[-1]
    for e in range(num_edges):                    # small static unrolled loop
        s = src_ref[e]                            # SMEM scalar index
        d = dst_ref[e]
        zs = z_ref[pl.ds(s, 1), :]                # dynamic row gather (1, C)
        zd = z_ref[pl.ds(d, 1), :]
        score = jnp.sum(zs * zd, axis=-1, keepdims=True)           # (1, 1)
        # Broadcast across the full lane width -> unmasked 128-lane store.
        o_ref[pl.ds(e, 1), :] = jnp.broadcast_to(score, (1, lanes))


def decode_edge_scores(z_f32, esrc, edst):
    num_e = int(esrc.shape[0])
    e_pad = max(8, _round_up(num_e, 8))
    src = jnp.zeros((e_pad,), jnp.int32).at[:num_e].set(esrc.astype(jnp.int32))
    dst = jnp.zeros((e_pad,), jnp.int32).at[:num_e].set(edst.astype(jnp.int32))
    out = pl.pallas_call(
        functools.partial(decode_kernel, num_edges=e_pad),
        out_shape=jax.ShapeDtypeStruct((e_pad, 128), jnp.float32),
        in_specs=[
            pl.BlockSpec(memory_space=pltpu.MemorySpace.SMEM),
            pl.BlockSpec(memory_space=pltpu.MemorySpace.SMEM),
            pl.BlockSpec(memory_space=pltpu.MemorySpace.VMEM),
        ],
        out_specs=pl.BlockSpec(memory_space=pltpu.MemorySpace.VMEM),
    )(src, dst, z_f32)
    return out[:num_e, 0]                          # .view(-1)


# ---------------------------------------------------------------------------
# Full forward pass
# ---------------------------------------------------------------------------
def _gcn_forward_impl(x, edge_index, edge_label_index, params, *,
                      tm=512, tk=512):
    n_real, cin_real = int(x.shape[0]), int(x.shape[1])
    w1, b1, w2, b2 = params
    chid_real = int(w1.shape[1])
    cout_real = int(w2.shape[1])

    n_pad = _round_up(n_real, 128)
    cin = _round_up(cin_real, 128)
    chid = _round_up(chid_real, 128)
    cout = _round_up(cout_real, 128)

    tile_m = _pick_tile(n_pad, tm)     # row tile (shared by all matmuls)
    tile_k = _pick_tile(n_pad, tk)     # reduction tile for A_hat aggregation
    tile_k_x1 = _pick_tile(cin, tk)    # reduction tile for X @ W1
    tile_k_x2 = _pick_tile(chid, tk)   # reduction tile for H @ W2

    # glue: dense symmetric-normalized adjacency (PyG gcn_norm w/ self loops)
    a_hat = build_normalized_adjacency(edge_index, n_real)
    a_p = _pad2(a_hat, (n_pad, n_pad)).astype(jnp.bfloat16)
    x_p = _pad2(x, (n_pad, cin)).astype(jnp.bfloat16)
    w1_p = _pad2(w1, (cin, chid)).astype(jnp.bfloat16)
    w2_p = _pad2(w2, (chid, cout)).astype(jnp.bfloat16)
    b1_p = _pad2(b1.reshape(1, -1), (1, chid)).astype(jnp.float32)
    b2_p = _pad2(b2.reshape(1, -1), (1, cout)).astype(jnp.float32)

    # layer 1 (+ ReLU): XW computed once, then aggregated with A_hat
    xw1 = matmul_bias_act(x_p, w1_p, None, apply_relu=False,
                          out_dtype=jnp.bfloat16, tm=tile_m, tk=tile_k_x1)
    h = matmul_bias_act(a_p, xw1, b1_p, apply_relu=True,
                        out_dtype=jnp.bfloat16, tm=tile_m, tk=tile_k)
    # layer 2: f32 output for the decoder
    xw2 = matmul_bias_act(h, w2_p, None, apply_relu=False,
                          out_dtype=jnp.bfloat16, tm=tile_m, tk=tile_k_x2)
    z = matmul_bias_act(a_p, xw2, b2_p, apply_relu=False,
                        out_dtype=jnp.float32, tm=tile_m, tk=tile_k)

    esrc, edst = edge_label_index
    return decode_edge_scores(z, esrc, edst)


gcn_forward = jax.jit(_gcn_forward_impl, static_argnames=("tm", "tk"))


def gcn_forward_ref(x, edge_index, edge_label_index, params):
    """Pure-JAX f32 reference of the same math (for a correctness check)."""
    w1, b1, w2, b2 = params
    a_hat = build_normalized_adjacency(edge_index, x.shape[0])
    h = jnp.maximum(a_hat @ (x @ w1) + b1, 0.0)
    z = a_hat @ (h @ w2) + b2
    s, d = edge_label_index
    return jnp.sum(z[s] * z[d], axis=-1).reshape(-1)


if __name__ == "__main__":
    key = jax.random.PRNGKey(0)
    k_x, k_w1, k_w2, k_e = jax.random.split(key, 4)

    # small shapes: N=256 nodes, in=4, hidden=32, out=16, 8 labeled edge pairs
    N, C_IN, C_HID, C_OUT, E_LBL = 256, 4, 32, 16, 8

    x = jax.random.normal(k_x, (N, C_IN), dtype=jnp.float32)

    # undirected ring graph (both directions)
    fwd = jnp.arange(N, dtype=jnp.int32)
    nxt = (fwd + 1) % N
    edge_index = (jnp.concatenate([fwd, nxt]), jnp.concatenate([nxt, fwd]))

    edge_label_index = (
        jax.random.randint(k_e, (E_LBL,), 0, N, dtype=jnp.int32),
        jax.random.randint(jax.random.fold_in(k_e, 1), (E_LBL,), 0, N,
                           dtype=jnp.int32),
    )

    # deterministic glorot-style init (GCNConv: weight (Cin,Cout), bias (Cout,))
    def glorot(k, shape):
        lim = (6.0 / (shape[0] + shape[1])) ** 0.5
        return jax.random.uniform(k, shape, jnp.float32, -lim, lim)

    params = (
        glorot(k_w1, (C_IN, C_HID)), jnp.zeros((C_HID,), jnp.float32),
        glorot(k_w2, (C_HID, C_OUT)), jnp.zeros((C_OUT,), jnp.float32),
    )

    out = gcn_forward(x, edge_index, edge_label_index, params)
    out = jax.block_until_ready(out)

    ref = gcn_forward_ref(x, edge_index, edge_label_index, params)
    assert out.shape == (E_LBL,)
    # bf16 MXU operands with f32 accumulation -> loose-ish tolerance
    assert jnp.allclose(out, ref, atol=2e-2, rtol=2e-2), (out, ref)

    print("KERNEL_OK")
</pallas_src>

<mosaic_0001>
module attributes {stable_mosaic.version = 11 : i64} {
  func.func private @main(%arg0: i32) attributes {dimension_semantics = [#tpu.dimension_semantics<core_parallel>], iteration_bounds = array<i64: 2>, tpu.core_type = #tpu.core_type<sc_scalar_subcore>, window_params = []} {
    return
  }
}

module attributes {stable_mosaic.version = 11 : i64} {
  func.func private @main(%arg0: i32) attributes {dimension_semantics = [#tpu.dimension_semantics<core_parallel>], iteration_bounds = array<i64: 2>, tpu.core_type = #tpu.core_type<sc_scalar_subcore>, window_params = []} {
    return
  }
}

module attributes {stable_mosaic.version = 11 : i64} {
  func.func @matmul_bias_act_kernel(%arg0: i32, %arg1: i32, %arg2: memref<256x128xbf16, #tpu.memory_space<vmem>>, %arg3: memref<128x128xbf16, #tpu.memory_space<vmem>>, %arg4: memref<1x128xf32, #tpu.memory_space<vmem>>, %arg5: memref<256x128xbf16, #tpu.memory_space<vmem>>, %arg6: memref<256x128xf32, #tpu.memory_space<vmem>>) attributes {dimension_semantics = [#tpu.dimension_semantics<parallel>, #tpu.dimension_semantics<arbitrary>], iteration_bounds = array<i64: 1, 1>, scalar_prefetch = 0 : i64, scratch_operands = 1 : i64, tpu.core_type = #tpu.core_type<tc>, window_params = [{transform_indices = @transform_0, window_bounds = array<i64: 256, 128>}, {transform_indices = @transform_1, window_bounds = array<i64: 128, 128>}, {pipeline_mode = #tpu.pipeline_mode<synchronous>, transform_indices = @transform_2, window_bounds = array<i64: 1, 128>}, {transform_indices = @transform_3, window_bounds = array<i64: 256, 128>}]} {
    %c0_i32 = arith.constant 0 : i32
    %0 = arith.cmpi eq, %arg1, %c0_i32 : i32
    %1 = arith.extui %0 : i1 to i32
    %c0_i32_0 = arith.constant 0 : i32
    %2 = arith.cmpi ne, %1, %c0_i32_0 : i32
    scf.if %2 {
      %cst_10 = arith.constant 0.000000e+00 : f32
      %12 = vector.broadcast %cst_10 : f32 to vector<256x128xf32>
      %c0_11 = arith.constant 0 : index
      %c0_12 = arith.constant 0 : index
      %13 = vector.load %arg6[%c0_11, %c0_12] : memref<256x128xf32, #tpu.memory_space<vmem>>, vector<256x128xf32>
      tpu.vector_store %arg6[%c0_11, %c0_12], %12 {strides = array<i32>} : memref<256x128xf32, #tpu.memory_space<vmem>>, vector<256x128xf32>,
    } else {
    }
    %c0 = arith.constant 0 : index
    %c0_1 = arith.constant 0 : index
    %3 = vector.load %arg6[%c0, %c0_1] : memref<256x128xf32, #tpu.memory_space<vmem>>, vector<256x128xf32>
    %c0_2 = arith.constant 0 : index
    %c0_3 = arith.constant 0 : index
    %4 = vector.load %arg2[%c0_2, %c0_3] : memref<256x128xbf16, #tpu.memory_space<vmem>>, vector<256x128xbf16>
    %c0_4 = arith.constant 0 : index
    %c0_5 = arith.constant 0 : index
    %5 = vector.load %arg3[%c0_4, %c0_5] : memref<128x128xbf16, #tpu.memory_space<vmem>>, vector<128x128xbf16>
    %cst = arith.constant dense<0.000000e+00> : vector<256x128xf32>
    %6 = tpu.matmul %4, %5, %cst {dimension_numbers = #tpu.dot_dimension_numbers<[1], [0], [0], [1], [0, 0, 1, 1], [], []>} : vector<256x128xbf16>, vector<128x128xbf16>, vector<256x128xf32> -> vector<256x128xf32>
    %7 = arith.addf %3, %6 : vector<256x128xf32>
    %c0_6 = arith.constant 0 : index
    %c0_7 = arith.constant 0 : index
    %8 = vector.load %arg6[%c0_6, %c0_7] : memref<256x128xf32, #tpu.memory_space<vmem>>, vector<256x128xf32>
    tpu.vector_store %arg6[%c0_6, %c0_7], %7 {strides = array<i32>} : memref<256x128xf32, #tpu.memory_space<vmem>>, vector<256x128xf32>,
    %c0_i32_8 = arith.constant 0 : i32
    %9 = arith.cmpi eq, %arg1, %c0_i32_8 : i32
    %10 = arith.extui %9 : i1 to i32
    %c0_i32_9 = arith.constant 0 : i32
    %11 = arith.cmpi ne, %10, %c0_i32_9 : i32
    scf.if %11 {
      %c0_10 = arith.constant 0 : index
      %c0_11 = arith.constant 0 : index
      %12 = vector.load %arg6[%c0_10, %c0_11] : memref<256x128xf32, #tpu.memory_space<vmem>>, vector<256x128xf32>
      %13 = arith.truncf %12 : vector<256x128xf32> to vector<256x128xbf16>
      %c0_12 = arith.constant 0 : index
      %c0_13 = arith.constant 0 : index
      %14 = vector.load %arg5[%c0_12, %c0_13] : memref<256x128xbf16, #tpu.memory_space<vmem>>, vector<256x128xbf16>
      tpu.vector_store %arg5[%c0_12, %c0_13], %13 {strides = array<i32>} : memref<256x128xbf16, #tpu.memory_space<vmem>>, vector<256x128xbf16>,
    } else {
    }
    return
  }
  func.func @transform_0(%arg0: i32, %arg1: i32) -> (i32, i32) {
    %c0_i32 = arith.constant 0 : i32
    return %arg0, %arg1 : i32, i32
  }
  func.func @transform_1(%arg0: i32, %arg1: i32) -> (i32, i32) {
    %c0_i32 = arith.constant 0 : i32
    %c0_i32_0 = arith.constant 0 : i32
    return %arg1, %c0_i32 : i32, i32
  }
  func.func @transform_2(%arg0: i32, %arg1: i32) -> (i32, i32) {
    %c0_i32 = arith.constant 0 : i32
    %c0_i32_0 = arith.constant 0 : i32
    %c0_i32_1 = arith.constant 0 : i32
    return %c0_i32, %c0_i32_0 : i32, i32
  }
  func.func @transform_3(%arg0: i32, %arg1: i32) -> (i32, i32) {
    %c0_i32 = arith.constant 0 : i32
    %c0_i32_0 = arith.constant 0 : i32
    return %arg0, %c0_i32 : i32, i32
  }
}

module attributes {stable_mosaic.version = 11 : i64} {
  func.func @matmul_bias_act_kernel(%arg0: i32, %arg1: i32, %arg2: memref<256x256xbf16, #tpu.memory_space<vmem>>, %arg3: memref<256x128xbf16, #tpu.memory_space<vmem>>, %arg4: memref<1x128xf32, #tpu.memory_space<vmem>>, %arg5: memref<256x128xf32, #tpu.memory_space<vmem>>, %arg6: memref<256x128xf32, #tpu.memory_space<vmem>>) attributes {dimension_semantics = [#tpu.dimension_semantics<parallel>, #tpu.dimension_semantics<arbitrary>], iteration_bounds = array<i64: 1, 1>, scalar_prefetch = 0 : i64, scratch_operands = 1 : i64, tpu.core_type = #tpu.core_type<tc>, window_params = [{transform_indices = @transform_0, window_bounds = array<i64: 256, 256>}, {transform_indices = @transform_1, window_bounds = array<i64: 256, 128>}, {pipeline_mode = #tpu.pipeline_mode<synchronous>, transform_indices = @transform_2, window_bounds = array<i64: 1, 128>}, {transform_indices = @transform_3, window_bounds = array<i64: 256, 128>}]} {
    %c0_i32 = arith.constant 0 : i32
    %0 = arith.cmpi eq, %arg1, %c0_i32 : i32
    %1 = arith.extui %0 : i1 to i32
    %c0_i32_0 = arith.constant 0 : i32
    %2 = arith.cmpi ne, %1, %c0_i32_0 : i32
    scf.if %2 {
      %cst_10 = arith.constant 0.000000e+00 : f32
      %12 = vector.broadcast %cst_10 : f32 to vector<256x128xf32>
      %c0_11 = arith.constant 0 : index
      %c0_12 = arith.constant 0 : index
      %13 = vector.load %arg6[%c0_11, %c0_12] : memref<256x128xf32, #tpu.memory_space<vmem>>, vector<256x128xf32>
      tpu.vector_store %arg6[%c0_11, %c0_12], %12 {strides = array<i32>} : memref<256x128xf32, #tpu.memory_space<vmem>>, vector<256x128xf32>,
    } else {
    }
    %c0 = arith.constant 0 : index
    %c0_1 = arith.constant 0 : index
    %3 = vector.load %arg6[%c0, %c0_1] : memref<256x128xf32, #tpu.memory_space<vmem>>, vector<256x128xf32>
    %c0_2 = arith.constant 0 : index
    %c0_3 = arith.constant 0 : index
    %4 = vector.load %arg2[%c0_2, %c0_3] : memref<256x256xbf16, #tpu.memory_space<vmem>>, vector<256x256xbf16>
    %c0_4 = arith.constant 0 : index
    %c0_5 = arith.constant 0 : index
    %5 = vector.load %arg3[%c0_4, %c0_5] : memref<256x128xbf16, #tpu.memory_space<vmem>>, vector<256x128xbf16>
    %cst = arith.constant dense<0.000000e+00> : vector<256x128xf32>
    %6 = tpu.matmul %4, %5, %cst {dimension_numbers = #tpu.dot_dimension_numbers<[1], [0], [0], [1], [0, 0, 1, 1], [], []>} : vector<256x256xbf16>, vector<256x128xbf16>, vector<256x128xf32> -> vector<256x128xf32>
    %7 = arith.addf %3, %6 : vector<256x128xf32>
    %c0_6 = arith.constant 0 : index
    %c0_7 = arith.constant 0 : index
    %8 = vector.load %arg6[%c0_6, %c0_7] : memref<256x128xf32, #tpu.memory_space<vmem>>, vector<256x128xf32>
    tpu.vector_store %arg6[%c0_6, %c0_7], %7 {strides = array<i32>} : memref<256x128xf32, #tpu.memory_space<vmem>>, vector<256x128xf32>,
    %c0_i32_8 = arith.constant 0 : i32
    %9 = arith.cmpi eq, %arg1, %c0_i32_8 : i32
    %10 = arith.extui %9 : i1 to i32
    %c0_i32_9 = arith.constant 0 : i32
    %11 = arith.cmpi ne, %10, %c0_i32_9 : i32
    scf.if %11 {
      %c0_10 = arith.constant 0 : index
      %c0_11 = arith.constant 0 : index
      %12 = vector.load %arg6[%c0_10, %c0_11] : memref<256x128xf32, #tpu.memory_space<vmem>>, vector<256x128xf32>
      %c0_12 = arith.constant 0 : index
      %c0_13 = arith.constant 0 : index
      %13 = vector.load %arg4[%c0_12, %c0_13] : memref<1x128xf32, #tpu.memory_space<vmem>>, vector<1x128xf32>
      %14 = vector.broadcast %13 : vector<1x128xf32> to vector<256x128xf32>
      %15 = arith.addf %12, %14 : vector<256x128xf32>
      %c0_14 = arith.constant 0 : index
      %c0_15 = arith.constant 0 : index
      %16 = vector.load %arg5[%c0_14, %c0_15] : memref<256x128xf32, #tpu.memory_space<vmem>>, vector<256x128xf32>
      tpu.vector_store %arg5[%c0_14, %c0_15], %15 {strides = array<i32>} : memref<256x128xf32, #tpu.memory_space<vmem>>, vector<256x128xf32>,
    } else {
    }
    return
  }
  func.func @transform_0(%arg0: i32, %arg1: i32) -> (i32, i32) {
    %c0_i32 = arith.constant 0 : i32
    return %arg0, %arg1 : i32, i32
  }
  func.func @transform_1(%arg0: i32, %arg1: i32) -> (i32, i32) {
    %c0_i32 = arith.constant 0 : i32
    %c0_i32_0 = arith.constant 0 : i32
    return %arg1, %c0_i32 : i32, i32
  }
  func.func @transform_2(%arg0: i32, %arg1: i32) -> (i32, i32) {
    %c0_i32 = arith.constant 0 : i32
    %c0_i32_0 = arith.constant 0 : i32
    %c0_i32_1 = arith.constant 0 : i32
    return %c0_i32, %c0_i32_0 : i32, i32
  }
  func.func @transform_3(%arg0: i32, %arg1: i32) -> (i32, i32) {
    %c0_i32 = arith.constant 0 : i32
    %c0_i32_0 = arith.constant 0 : i32
    return %arg0, %c0_i32 : i32, i32
  }
}

module attributes {stable_mosaic.version = 11 : i64} {
  func.func @matmul_bias_act_kernel(%arg0: i32, %arg1: i32, %arg2: memref<256x256xbf16, #tpu.memory_space<vmem>>, %arg3: memref<256x128xbf16, #tpu.memory_space<vmem>>, %arg4: memref<1x128xf32, #tpu.memory_space<vmem>>, %arg5: memref<256x128xbf16, #tpu.memory_space<vmem>>, %arg6: memref<256x128xf32, #tpu.memory_space<vmem>>) attributes {dimension_semantics = [#tpu.dimension_semantics<parallel>, #tpu.dimension_semantics<arbitrary>], iteration_bounds = array<i64: 1, 1>, scalar_prefetch = 0 : i64, scratch_operands = 1 : i64, tpu.core_type = #tpu.core_type<tc>, window_params = [{transform_indices = @transform_0, window_bounds = array<i64: 256, 256>}, {transform_indices = @transform_1, window_bounds = array<i64: 256, 128>}, {pipeline_mode = #tpu.pipeline_mode<synchronous>, transform_indices = @transform_2, window_bounds = array<i64: 1, 128>}, {transform_indices = @transform_3, window_bounds = array<i64: 256, 128>}]} {
    %c0_i32 = arith.constant 0 : i32
    %0 = arith.cmpi eq, %arg1, %c0_i32 : i32
    %1 = arith.extui %0 : i1 to i32
    %c0_i32_0 = arith.constant 0 : i32
    %2 = arith.cmpi ne, %1, %c0_i32_0 : i32
    scf.if %2 {
      %cst_10 = arith.constant 0.000000e+00 : f32
      %12 = vector.broadcast %cst_10 : f32 to vector<256x128xf32>
      %c0_11 = arith.constant 0 : index
      %c0_12 = arith.constant 0 : index
      %13 = vector.load %arg6[%c0_11, %c0_12] : memref<256x128xf32, #tpu.memory_space<vmem>>, vector<256x128xf32>
      tpu.vector_store %arg6[%c0_11, %c0_12], %12 {strides = array<i32>} : memref<256x128xf32, #tpu.memory_space<vmem>>, vector<256x128xf32>,
    } else {
    }
    %c0 = arith.constant 0 : index
    %c0_1 = arith.constant 0 : index
    %3 = vector.load %arg6[%c0, %c0_1] : memref<256x128xf32, #tpu.memory_space<vmem>>, vector<256x128xf32>
    %c0_2 = arith.constant 0 : index
    %c0_3 = arith.constant 0 : index
    %4 = vector.load %arg2[%c0_2, %c0_3] : memref<256x256xbf16, #tpu.memory_space<vmem>>, vector<256x256xbf16>
    %c0_4 = arith.constant 0 : index
    %c0_5 = arith.constant 0 : index
    %5 = vector.load %arg3[%c0_4, %c0_5] : memref<256x128xbf16, #tpu.memory_space<vmem>>, vector<256x128xbf16>
    %cst = arith.constant dense<0.000000e+00> : vector<256x128xf32>
    %6 = tpu.matmul %4, %5, %cst {dimension_numbers = #tpu.dot_dimension_numbers<[1], [0], [0], [1], [0, 0, 1, 1], [], []>} : vector<256x256xbf16>, vector<256x128xbf16>, vector<256x128xf32> -> vector<256x128xf32>
    %7 = arith.addf %3, %6 : vector<256x128xf32>
    %c0_6 = arith.constant 0 : index
    %c0_7 = arith.constant 0 : index
    %8 = vector.load %arg6[%c0_6, %c0_7] : memref<256x128xf32, #tpu.memory_space<vmem>>, vector<256x128xf32>
    tpu.vector_store %arg6[%c0_6, %c0_7], %7 {strides = array<i32>} : memref<256x128xf32, #tpu.memory_space<vmem>>, vector<256x128xf32>,
    %c0_i32_8 = arith.constant 0 : i32
    %9 = arith.cmpi eq, %arg1, %c0_i32_8 : i32
    %10 = arith.extui %9 : i1 to i32
    %c0_i32_9 = arith.constant 0 : i32
    %11 = arith.cmpi ne, %10, %c0_i32_9 : i32
    scf.if %11 {
      %c0_10 = arith.constant 0 : index
      %c0_11 = arith.constant 0 : index
      %12 = vector.load %arg6[%c0_10, %c0_11] : memref<256x128xf32, #tpu.memory_space<vmem>>, vector<256x128xf32>
      %c0_12 = arith.constant 0 : index
      %c0_13 = arith.constant 0 : index
      %13 = vector.load %arg4[%c0_12, %c0_13] : memref<1x128xf32, #tpu.memory_space<vmem>>, vector<1x128xf32>
      %14 = vector.broadcast %13 : vector<1x128xf32> to vector<256x128xf32>
      %15 = arith.addf %12, %14 : vector<256x128xf32>
      %cst_14 = arith.constant 0.000000e+00 : f32
      %16 = vector.broadcast %cst_14 : f32 to vector<256x128xf32>
      %17 = arith.maximumf %15, %16 : vector<256x128xf32>
      %18 = arith.truncf %17 : vector<256x128xf32> to vector<256x128xbf16>
      %c0_15 = arith.constant 0 : index
      %c0_16 = arith.constant 0 : index
      %19 = vector.load %arg5[%c0_15, %c0_16] : memref<256x128xbf16, #tpu.memory_space<vmem>>, vector<256x128xbf16>
      tpu.vector_store %arg5[%c0_15, %c0_16], %18 {strides = array<i32>} : memref<256x128xbf16, #tpu.memory_space<vmem>>, vector<256x128xbf16>,
    } else {
    }
    return
  }
  func.func @transform_0(%arg0: i32, %arg1: i32) -> (i32, i32) {
    %c0_i32 = arith.constant 0 : i32
    return %arg0, %arg1 : i32, i32
  }
  func.func @transform_1(%arg0: i32, %arg1: i32) -> (i32, i32) {
    %c0_i32 = arith.constant 0 : i32
    %c0_i32_0 = arith.constant 0 : i32
    return %arg1, %c0_i32 : i32, i32
  }
  func.func @transform_2(%arg0: i32, %arg1: i32) -> (i32, i32) {
    %c0_i32 = arith.constant 0 : i32
    %c0_i32_0 = arith.constant 0 : i32
    %c0_i32_1 = arith.constant 0 : i32
    return %c0_i32, %c0_i32_0 : i32, i32
  }
  func.func @transform_3(%arg0: i32, %arg1: i32) -> (i32, i32) {
    %c0_i32 = arith.constant 0 : i32
    %c0_i32_0 = arith.constant 0 : i32
    return %arg0, %c0_i32 : i32, i32
  }
}

module attributes {stable_mosaic.version = 11 : i64} {
  func.func @decode_kernel(%arg0: memref<8xi32, #tpu.memory_space<smem>>, %arg1: memref<8xi32, #tpu.memory_space<smem>>, %arg2: memref<256x128xf32, #tpu.memory_space<vmem>>, %arg3: memref<8x128xf32, #tpu.memory_space<vmem>>) attributes {dimension_semantics = [], scalar_prefetch = 0 : i64, scratch_operands = 0 : i64, tpu.core_type = #tpu.core_type<tc>} {
    %c0 = arith.constant 0 : index
    %0 = memref.load %arg0[%c0] : memref<8xi32, #tpu.memory_space<smem>>
    %c0_0 = arith.constant 0 : index
    %1 = memref.load %arg1[%c0_0] : memref<8xi32, #tpu.memory_space<smem>>
    %2 = arith.index_cast %0 : i32 to index
    %c0_1 = arith.constant 0 : index
    %3 = vector.load %arg2[%2, %c0_1] : memref<256x128xf32, #tpu.memory_space<vmem>>, vector<1x128xf32>
    %4 = arith.index_cast %1 : i32 to index
    %c0_2 = arith.constant 0 : index
    %5 = vector.load %arg2[%4, %c0_2] : memref<256x128xf32, #tpu.memory_space<vmem>>, vector<1x128xf32>
    %6 = arith.mulf %3, %5 : vector<1x128xf32>
    %cst = arith.constant dense<0.000000e+00> : vector<1xf32>
    %7 = vector.multi_reduction <add>, %6, %cst [1] : vector<1x128xf32> to vector<1xf32>
    %8 = vector.shape_cast %7 : vector<1xf32> to vector<1x1xf32>
    %9 = vector.shape_cast %8 : vector<1x1xf32> to vector<1x1xf32>
    %10 = vector.broadcast %9 : vector<1x1xf32> to vector<1x128xf32>
    %c0_3 = arith.constant 0 : index
    %c0_4 = arith.constant 0 : index
    %11 = vector.load %arg3[%c0_3, %c0_4] : memref<8x128xf32, #tpu.memory_space<vmem>>, vector<1x128xf32>
    tpu.vector_store %arg3[%c0_3, %c0_4], %10 {strides = array<i32>} : memref<8x128xf32, #tpu.memory_space<vmem>>, vector<1x128xf32>,
    %c1 = arith.constant 1 : index
    %12 = memref.load %arg0[%c1] : memref<8xi32, #tpu.memory_space<smem>>
    %c1_5 = arith.constant 1 : index
    %13 = memref.load %arg1[%c1_5] : memref<8xi32, #tpu.memory_space<smem>>
    %14 = arith.index_cast %12 : i32 to index
    %c0_6 = arith.constant 0 : index
    %15 = vector.load %arg2[%14, %c0_6] : memref<256x128xf32, #tpu.memory_space<vmem>>, vector<1x128xf32>
    %16 = arith.index_cast %13 : i32 to index
    %c0_7 = arith.constant 0 : index
    %17 = vector.load %arg2[%16, %c0_7] : memref<256x128xf32, #tpu.memory_space<vmem>>, vector<1x128xf32>
    %18 = arith.mulf %15, %17 : vector<1x128xf32>
    %cst_8 = arith.constant dense<0.000000e+00> : vector<1xf32>
    %19 = vector.multi_reduction <add>, %18, %cst_8 [1] : vector<1x128xf32> to vector<1xf32>
    %20 = vector.shape_cast %19 : vector<1xf32> to vector<1x1xf32>
    %21 = vector.shape_cast %20 : vector<1x1xf32> to vector<1x1xf32>
    %22 = vector.broadcast %21 : vector<1x1xf32> to vector<1x128xf32>
    %c1_9 = arith.constant 1 : index
    %c0_10 = arith.constant 0 : index
    %23 = vector.load %arg3[%c1_9, %c0_10] : memref<8x128xf32, #tpu.memory_space<vmem>>, vector<1x128xf32>
    tpu.vector_store %arg3[%c1_9, %c0_10], %22 {strides = array<i32>} : memref<8x128xf32, #tpu.memory_space<vmem>>, vector<1x128xf32>,
    %c2 = arith.constant 2 : index
    %24 = memref.load %arg0[%c2] : memref<8xi32, #tpu.memory_space<smem>>
    %c2_11 = arith.constant 2 : index
    %25 = memref.load %arg1[%c2_11] : memref<8xi32, #tpu.memory_space<smem>>
    %26 = arith.index_cast %24 : i32 to index
    %c0_12 = arith.constant 0 : index
    %27 = vector.load %arg2[%26, %c0_12] : memref<256x128xf32, #tpu.memory_space<vmem>>, vector<1x128xf32>
    %28 = arith.index_cast %25 : i32 to index
    %c0_13 = arith.constant 0 : index
    %29 = vector.load %arg2[%28, %c0_13] : memref<256x128xf32, #tpu.memory_space<vmem>>, vector<1x128xf32>
    %30 = arith.mulf %27, %29 : vector<1x128xf32>
    %cst_14 = arith.constant dense<0.000000e+00> : vector<1xf32>
    %31 = vector.multi_reduction <add>, %30, %cst_14 [1] : vector<1x128xf32> to vector<1xf32>
    %32 = vector.shape_cast %31 : vector<1xf32> to vector<1x1xf32>
    %33 = vector.shape_cast %32 : vector<1x1xf32> to vector<1x1xf32>
    %34 = vector.broadcast %33 : vector<1x1xf32> to vector<1x128xf32>
    %c2_15 = arith.constant 2 : index
    %c0_16 = arith.constant 0 : index
    %35 = vector.load %arg3[%c2_15, %c0_16] : memref<8x128xf32, #tpu.memory_space<vmem>>, vector<1x128xf32>
    tpu.vector_store %arg3[%c2_15, %c0_16], %34 {strides = array<i32>} : memref<8x128xf32, #tpu.memory_space<vmem>>, vector<1x128xf32>,
    %c3 = arith.constant 3 : index
    %36 = memref.load %arg0[%c3] : memref<8xi32, #tpu.memory_space<smem>>
    %c3_17 = arith.constant 3 : index
    %37 = memref.load %arg1[%c3_17] : memref<8xi32, #tpu.memory_space<smem>>
    %38 = arith.index_cast %36 : i32 to index
    %c0_18 = arith.constant 0 : index
    %39 = vector.load %arg2[%38, %c0_18] : memref<256x128xf32, #tpu.memory_space<vmem>>, vector<1x128xf32>
    %40 = arith.index_cast %37 : i32 to index
    %c0_19 = arith.constant 0 : index
    %41 = vector.load %arg2[%40, %c0_19] : memref<256x128xf32, #tpu.memory_space<vmem>>, vector<1x128xf32>
    %42 = arith.mulf %39, %41 : vector<1x128xf32>
    %cst_20 = arith.constant dense<0.000000e+00> : vector<1xf32>
    %43 = vector.multi_reduction <add>, %42, %cst_20 [1] : vector<1x128xf32> to vector<1xf32>
    %44 = vector.shape_cast %43 : vector<1xf32> to vector<1x1xf32>
    %45 = vector.shape_cast %44 : vector<1x1xf32> to vector<1x1xf32>
    %46 = vector.broadcast %45 : vector<1x1xf32> to vector<1x128xf32>
    %c3_21 = arith.constant 3 : index
    %c0_22 = arith.constant 0 : index
    %47 = vector.load %arg3[%c3_21, %c0_22] : memref<8x128xf32, #tpu.memory_space<vmem>>, vector<1x128xf32>
    tpu.vector_store %arg3[%c3_21, %c0_22], %46 {strides = array<i32>} : memref<8x128xf32, #tpu.memory_space<vmem>>, vector<1x128xf32>,
    %c4 = arith.constant 4 : index
    %48 = memref.load %arg0[%c4] : memref<8xi32, #tpu.memory_space<smem>>
    %c4_23 = arith.constant 4 : index
    %49 = memref.load %arg1[%c4_23] : memref<8xi32, #tpu.memory_space<smem>>
    %50 = arith.index_cast %48 : i32 to index
    %c0_24 = arith.constant 0 : index
    %51 = vector.load %arg2[%50, %c0_24] : memref<256x128xf32, #tpu.memory_space<vmem>>, vector<1x128xf32>
    %52 = arith.index_cast %49 : i32 to index
    %c0_25 = arith.constant 0 : index
    %53 = vector.load %arg2[%52, %c0_25] : memref<256x128xf32, #tpu.memory_space<vmem>>, vector<1x128xf32>
    %54 = arith.mulf %51, %53 : vector<1x128xf32>
    %cst_26 = arith.constant dense<0.000000e+00> : vector<1xf32>
    %55 = vector.multi_reduction <add>, %54, %cst_26 [1] : vector<1x128xf32> to vector<1xf32>
    %56 = vector.shape_cast %55 : vector<1xf32> to vector<1x1xf32>
    %57 = vector.shape_cast %56 : vector<1x1xf32> to vector<1x1xf32>
    %58 = vector.broadcast %57 : vector<1x1xf32> to vector<1x128xf32>
    %c4_27 = arith.constant 4 : index
    %c0_28 = arith.constant 0 : index
    %59 = vector.load %arg3[%c4_27, %c0_28] : memref<8x128xf32, #tpu.memory_space<vmem>>, vector<1x128xf32>
    tpu.vector_store %arg3[%c4_27, %c0_28], %58 {strides = array<i32>} : memref<8x128xf32, #tpu.memory_space<vmem>>, vector<1x128xf32>,
    %c5 = arith.constant 5 : index
    %60 = memref.load %arg0[%c5] : memref<8xi32, #tpu.memory_space<smem>>
    %c5_29 = arith.constant 5 : index
    %61 = memref.load %arg1[%c5_29] : memref<8xi32, #tpu.memory_space<smem>>
    %62 = arith.index_cast %60 : i32 to index
    %c0_30 = arith.constant 0 : index
    %63 = vector.load %arg2[%62, %c0_30] : memref<256x128xf32, #tpu.memory_space<vmem>>, vector<1x128xf32>
    %64 = arith.index_cast %61 : i32 to index
    %c0_31 = arith.constant 0 : index
    %65 = vector.load %arg2[%64, %c0_31] : memref<256x128xf32, #tpu.memory_space<vmem>>, vector<1x128xf32>
    %66 = arith.mulf %63, %65 : vector<1x128xf32>
    %cst_32 = arith.constant dense<0.000000e+00> : vector<1xf32>
    %67 = vector.multi_reduction <add>, %66, %cst_32 [1] : vector<1x128xf32> to vector<1xf32>
    %68 = vector.shape_cast %67 : vector<1xf32> to vector<1x1xf32>
    %69 = vector.shape_cast %68 : vector<1x1xf32> to vector<1x1xf32>
    %70 = vector.broadcast %69 : vector<1x1xf32> to vector<1x128xf32>
    %c5_33 = arith.constant 5 : index
    %c0_34 = arith.constant 0 : index
    %71 = vector.load %arg3[%c5_33, %c0_34] : memref<8x128xf32, #tpu.memory_space<vmem>>, vector<1x128xf32>
    tpu.vector_store %arg3[%c5_33, %c0_34], %70 {strides = array<i32>} : memref<8x128xf32, #tpu.memory_space<vmem>>, vector<1x128xf32>,
    %c6 = arith.constant 6 : index
    %72 = memref.load %arg0[%c6] : memref<8xi32, #tpu.memory_space<smem>>
    %c6_35 = arith.constant 6 : index
    %73 = memref.load %arg1[%c6_35] : memref<8xi32, #tpu.memory_space<smem>>
    %74 = arith.index_cast %72 : i32 to index
    %c0_36 = arith.constant 0 : index
    %75 = vector.load %arg2[%74, %c0_36] : memref<256x128xf32, #tpu.memory_space<vmem>>, vector<1x128xf32>
    %76 = arith.index_cast %73 : i32 to index
    %c0_37 = arith.constant 0 : index
    %77 = vector.load %arg2[%76, %c0_37] : memref<256x128xf32, #tpu.memory_space<vmem>>, vector<1x128xf32>
    %78 = arith.mulf %75, %77 : vector<1x128xf32>
    %cst_38 = arith.constant dense<0.000000e+00> : vector<1xf32>
    %79 = vector.multi_reduction <add>, %78, %cst_38 [1] : vector<1x128xf32> to vector<1xf32>
    %80 = vector.shape_cast %79 : vector<1xf32> to vector<1x1xf32>
    %81 = vector.shape_cast %80 : vector<1x1xf32> to vector<1x1xf32>
    %82 = vector.broadcast %81 : vector<1x1xf32> to vector<1x128xf32>
    %c6_39 = arith.constant 6 : index
    %c0_40 = arith.constant 0 : index
    %83 = vector.load %arg3[%c6_39, %c0_40] : memref<8x128xf32, #tpu.memory_space<vmem>>, vector<1x128xf32>
    tpu.vector_store %arg3[%c6_39, %c0_40], %82 {strides = array<i32>} : memref<8x128xf32, #tpu.memory_space<vmem>>, vector<1x128xf32>,
    %c7 = arith.constant 7 : index
    %84 = memref.load %arg0[%c7] : memref<8xi32, #tpu.memory_space<smem>>
    %c7_41 = arith.constant 7 : index
    %85 = memref.load %arg1[%c7_41] : memref<8xi32, #tpu.memory_space<smem>>
    %86 = arith.index_cast %84 : i32 to index
    %c0_42 = arith.constant 0 : index
    %87 = vector.load %arg2[%86, %c0_42] : memref<256x128xf32, #tpu.memory_space<vmem>>, vector<1x128xf32>
    %88 = arith.index_cast %85 : i32 to index
    %c0_43 = arith.constant 0 : index
    %89 = vector.load %arg2[%88, %c0_43] : memref<256x128xf32, #tpu.memory_space<vmem>>, vector<1x128xf32>
    %90 = arith.mulf %87, %89 : vector<1x128xf32>
    %cst_44 = arith.constant dense<0.000000e+00> : vector<1xf32>
    %91 = vector.multi_reduction <add>, %90, %cst_44 [1] : vector<1x128xf32> to vector<1xf32>
    %92 = vector.shape_cast %91 : vector<1xf32> to vector<1x1xf32>
    %93 = vector.shape_cast %92 : vector<1x1xf32> to vector<1x1xf32>
    %94 = vector.broadcast %93 : vector<1x1xf32> to vector<1x128xf32>
    %c7_45 = arith.constant 7 : index
    %c0_46 = arith.constant 0 : index
    %95 = vector.load %arg3[%c7_45, %c0_46] : memref<8x128xf32, #tpu.memory_space<vmem>>, vector<1x128xf32>
    tpu.vector_store %arg3[%c7_45, %c0_46], %94 {strides = array<i32>} : memref<8x128xf32, #tpu.memory_space<vmem>>, vector<1x128xf32>,
    return
  }
}

</mosaic_0001>

<llo_original>
// kernel: mul.1
$region0: #{mul.1}
  #allocation0 [shape = 's32[1]{0}', space=sflag, size = 0x4, scoped, tag = 'scoped memory for mul.1']
  %s0 = inlined_call_operand.vmem [shape: f32[768], index: 0, kind: input, shape index: {}]
  %s1 = inlined_call_operand.vmem [shape: f32[768], index: 1, kind: input, shape index: {}]
  %s2 = inlined_call_operand.vmem [shape: f32[768], index: 2, kind: output, shape index: {}]
  %v3 = vld [vmem:[%s0] sm:$0x3f]
  %v4 = vld [vmem:[%s1] sm:$0x3f]
  %5 = xla_tuple %v3, %v4
  %6 = xla_tuple %5
  %v7 = vmul.f32 %v3, %v4
  %8 = xla_tuple %v7
  %9 = vst [vmem:[%s2] sm:$0xff] %v7

// kernel: _gcn_forward_impl.5
$region0: #{_gcn_forward_impl.5}
  #allocation0 [shape = 'u32[]', space=smem, size = 0x4, offset = 0x4, fixed_abs, tag = 'smem constant byte address 0x4 - core index']
  #allocation1 [shape = 'u32[144,128]{1,0:T(1,128)}', space=vmem, size = 0x12000, scoped, tag = 'internal scratch']
  #allocation2 [shape = 'f32[256,128]{1,0:T(8,128)}', space=vmem, size = 0x20000, scoped, tag = 'scratch operand']
  %s0 = inlined_call_operand.vmem [shape: bf16[256,128], index: 0, kind: input, shape index: {}]
  %s1 = inlined_call_operand.vmem [shape: bf16[128,128], index: 1, kind: input, shape index: {}]
  %s2 = inlined_call_operand.vmem [shape: f32[1,128], index: 2, kind: input, shape index: {}]
  %s3 = inlined_call_operand.vmem [shape: bf16[256,128], index: 3, kind: output, shape index: {}]
  %s4 = sld [smem:[#allocation0]]
  $region30: #{_gcn_forward_impl.5} parent=0
    _
  %s6 = ssub.s32 1, %s4
  %s7 = scalar_select 0, %s6, %s4
  // Predicated region
  $region2: #{_gcn_forward_impl.5} parent=0 // pred_check
    _
  $region3: #{_gcn_forward_impl.5} parent=0 // pred_check_branch
    %9 = sbr.rel (0) target = $region5
  $region4: #{_gcn_forward_impl.5} parent=0 // pred_region
    _
  $region5: #{_gcn_forward_impl.5} parent=0 // pred_fallthru
    _
  // Predicated region
  $region6: #{_gcn_forward_impl.5} parent=0 // pred_check
    _
  $region7: #{_gcn_forward_impl.5} parent=0 // pred_check_branch
    %11 = sbr.rel (0) target = $region9
  $region8: #{_gcn_forward_impl.5} parent=0 // pred_region
    _
  $region9: #{_gcn_forward_impl.5} parent=0 // pred_fallthru
    _
  // Predicated region
  $region10: #{_gcn_forward_impl.5} parent=0 // pred_check
    _
  $region11: #{_gcn_forward_impl.5} parent=0 // pred_check_branch
    %13 = sbr.rel (0) target = $region13
  $region12: #{_gcn_forward_impl.5} parent=0 // pred_region
    _
  $region13: #{_gcn_forward_impl.5} parent=0 // pred_fallthru
    _
  %p15 = scmp.eq.s32.totalorder 0, 0
  // Predicated region
  $region14: #{_gcn_forward_impl.5} parent=0 // pred_check
    %p16 = pneg %p15
  $region15: #{_gcn_forward_impl.5} parent=0 // pred_check_branch
    %18 = sbr.rel (%p16) target = $region17
  $region16: #{_gcn_forward_impl.5} parent=0 // pred_region
    %19 = vst [vmem:[#allocation2] sm:$0xff] 0.0
    %20 = vst [vmem:[#allocation2 + $0x8] sm:$0xff] 0.0
    %21 = vst [vmem:[#allocation2 + $0x10] sm:$0xff] 0.0
    %22 = vst [vmem:[#allocation2 + $0x18] sm:$0xff] 0.0
    %23 = vst [vmem:[#allocation2 + $0x20] sm:$0xff] 0.0
    %24 = vst [vmem:[#allocation2 + $0x28] sm:$0xff] 0.0
    %25 = vst [vmem:[#allocation2 + $0x30] sm:$0xff] 0.0
    %26 = vst [vmem:[#allocation2 + $0x38] sm:$0xff] 0.0
    %27 = vst [vmem:[#allocation2 + $0x40] sm:$0xff] 0.0
    %28 = vst [vmem:[#allocation2 + $0x48] sm:$0xff] 0.0
    %29 = vst [vmem:[#allocation2 + $0x50] sm:$0xff] 0.0
    %30 = vst [vmem:[#allocation2 + $0x58] sm:$0xff] 0.0
    %31 = vst [vmem:[#allocation2 + $0x60] sm:$0xff] 0.0
    %32 = vst [vmem:[#allocation2 + $0x68] sm:$0xff] 0.0
    %33 = vst [vmem:[#allocation2 + $0x70] sm:$0xff] 0.0
    %34 = vst [vmem:[#allocation2 + $0x78] sm:$0xff] 0.0
    %35 = vst [vmem:[#allocation2 + $0x80] sm:$0xff] 0.0
    %36 = vst [vmem:[#allocation2 + $0x88] sm:$0xff] 0.0
    %37 = vst [vmem:[#allocation2 + $0x90] sm:$0xff] 0.0
    %38 = vst [vmem:[#allocation2 + $0x98] sm:$0xff] 0.0
    %39 = vst [vmem:[#allocation2 + $0xa0] sm:$0xff] 0.0
    %40 = vst [vmem:[#allocation2 + $0xa8] sm:$0xff] 0.0
    %41 = vst [vmem:[#allocation2 + $0xb0] sm:$0xff] 0.0
    %42 = vst [vmem:[#allocation2 + $0xb8] sm:$0xff] 0.0
    %43 = vst [vmem:[#allocation2 + $0xc0] sm:$0xff] 0.0
    %44 = vst [vmem:[#allocation2 + $0xc8] sm:$0xff] 0.0
    %45 = vst [vmem:[#allocation2 + $0xd0] sm:$0xff] 0.0
    %46 = vst [vmem:[#allocation2 + $0xd8] sm:$0xff] 0.0
    %47 = vst [vmem:[#allocation2 + $0xe0] sm:$0xff] 0.0
    %48 = vst [vmem:[#allocation2 + $0xe8] sm:$0xff] 0.0
    %49 = vst [vmem:[#allocation2 + $0xf0] sm:$0xff] 0.0
    %50 = vst [vmem:[#allocation2 + $0xf8] sm:$0xff] 0.0
  $region17: #{_gcn_forward_impl.5} parent=0 // pred_fallthru
    _
  %v51 = vld [vmem:[#allocation2] sm:$0xff]
  %v52 = vld [vmem:[#allocation2 + $0x8] sm:$0xff]
  %v53 = vld [vmem:[#allocation2 + $0x10] sm:$0xff]
  %v54 = vld [vmem:[#allocation2 + $0x18] sm:$0xff]
  %v55 = vld [vmem:[#allocation2 + $0x20] sm:$0xff]
  %v56 = vld [vmem:[#allocation2 + $0x28] sm:$0xff]
  %v57 = vld [vmem:[#allocation2 + $0x30] sm:$0xff]
  %v58 = vld [vmem:[#allocation2 + $0x38] sm:$0xff]
  %v59 = vld [vmem:[#allocation2 + $0x40] sm:$0xff]
  %v60 = vld [vmem:[#allocation2 + $0x48] sm:$0xff]
  %v61 = vld [vmem:[#allocation2 + $0x50] sm:$0xff]
  %v62 = vld [vmem:[#allocation2 + $0x58] sm:$0xff]
  %v63 = vld [vmem:[#allocation2 + $0x60] sm:$0xff]
  %v64 = vld [vmem:[#allocation2 + $0x68] sm:$0xff]
  %v65 = vld [vmem:[#allocation2 + $0x70] sm:$0xff]
  %v66 = vld [vmem:[#allocation2 + $0x78] sm:$0xff]
  %v67 = vld [vmem:[#allocation2 + $0x80] sm:$0xff]
  %v68 = vld [vmem:[#allocation2 + $0x88] sm:$0xff]
  %v69 = vld [vmem:[#allocation2 + $0x90] sm:$0xff]
  %v70 = vld [vmem:[#allocation2 + $0x98] sm:$0xff]
  %v71 = vld [vmem:[#allocation2 + $0xa0] sm:$0xff]
  %v72 = vld [vmem:[#allocation2 + $0xa8] sm:$0xff]
  %v73 = vld [vmem:[#allocation2 + $0xb0] sm:$0xff]
  %v74 = vld [vmem:[#allocation2 + $0xb8] sm:$0xff]
  %v75 = vld [vmem:[#allocation2 + $0xc0] sm:$0xff]
  %v76 = vld [vmem:[#allocation2 + $0xc8] sm:$0xff]
  %v77 = vld [vmem:[#allocation2 + $0xd0] sm:$0xff]
  %v78 = vld [vmem:[#allocation2 + $0xd8] sm:$0xff]
  %v79 = vld [vmem:[#allocation2 + $0xe0] sm:$0xff]
  %v80 = vld [vmem:[#allocation2 + $0xe8] sm:$0xff]
  %v81 = vld [vmem:[#allocation2 + $0xf0] sm:$0xff]
  %v82 = vld [vmem:[#allocation2 + $0xf8] sm:$0xff]
  %v83 = vld [vmem:[%s0] sm:$0xf]
  %v84 = vld [vmem:[%s0 + $0x4] sm:$0xf]
  %v85 = vld [vmem:[%s0 + $0x8] sm:$0xf]
  %v86 = vld [vmem:[%s0 + $0xc] sm:$0xf]
  %v87 = vld [vmem:[%s0 + $0x10] sm:$0xf]
  %v88 = vld [vmem:[%s0 + $0x14] sm:$0xf]
  %v89 = vld [vmem:[%s0 + $0x18] sm:$0xf]
  %v90 = vld [vmem:[%s0 + $0x1c] sm:$0xf]
  %v91 = vld [vmem:[%s0 + $0x20] sm:$0xf]
  %v92 = vld [vmem:[%s0 + $0x24] sm:$0xf]
  %v93 = vld [vmem:[%s0 + $0x28] sm:$0xf]
  %v94 = vld [vmem:[%s0 + $0x2c] sm:$0xf]
  %v95 = vld [vmem:[%s0 + $0x30] sm:$0xf]
  %v96 = vld [vmem:[%s0 + $0x34] sm:$0xf]
  %v97 = vld [vmem:[%s0 + $0x38] sm:$0xf]
  %v98 = vld [vmem:[%s0 + $0x3c] sm:$0xf]
  %v99 = vld [vmem:[%s0 + $0x40] sm:$0xf]
  %v100 = vld [vmem:[%s0 + $0x44] sm:$0xf]
  %v101 = vld [vmem:[%s0 + $0x48] sm:$0xf]
  %v102 = vld [vmem:[%s0 + $0x4c] sm:$0xf]
  %v103 = vld [vmem:[%s0 + $0x50] sm:$0xf]
  %v104 = vld [vmem:[%s0 + $0x54] sm:$0xf]
  %v105 = vld [vmem:[%s0 + $0x58] sm:$0xf]
  %v106 = vld [vmem:[%s0 + $0x5c] sm:$0xf]
  %v107 = vld [vmem:[%s0 + $0x60] sm:$0xf]
  %v108 = vld [vmem:[%s0 + $0x64] sm:$0xf]
  %v109 = vld [vmem:[%s0 + $0x68] sm:$0xf]
  %v110 = vld [vmem:[%s0 + $0x6c] sm:$0xf]
  %v111 = vld [vmem:[%s0 + $0x70] sm:$0xf]
  %v112 = vld [vmem:[%s0 + $0x74] sm:$0xf]
  %v113 = vld [vmem:[%s0 + $0x78] sm:$0xf]
  %v114 = vld [vmem:[%s0 + $0x7c] sm:$0xf]
  %v115 = vld [vmem:[%s1] sm:$0xf]
  %v116 = vld [vmem:[%s1 + $0x4] sm:$0xf]
  %v117 = vld [vmem:[%s1 + $0x8] sm:$0xf]
  %v118 = vld [vmem:[%s1 + $0xc] sm:$0xf]
  %v119 = vld [vmem:[%s1 + $0x10] sm:$0xf]
  %v120 = vld [vmem:[%s1 + $0x14] sm:$0xf]
  %v121 = vld [vmem:[%s1 + $0x18] sm:$0xf]
  %v122 = vld [vmem:[%s1 + $0x1c] sm:$0xf]
  %v123 = vld [vmem:[%s1 + $0x20] sm:$0xf]
  %v124 = vld [vmem:[%s1 + $0x24] sm:$0xf]
  %v125 = vld [vmem:[%s1 + $0x28] sm:$0xf]
  %v126 = vld [vmem:[%s1 + $0x2c] sm:$0xf]
  %v127 = vld [vmem:[%s1 + $0x30] sm:$0xf]
  %v128 = vld [vmem:[%s1 + $0x34] sm:$0xf]
  %v129 = vld [vmem:[%s1 + $0x38] sm:$0xf]
  %v130 = vld [vmem:[%s1 + $0x3c] sm:$0xf]
  %v163 = vunpack.c.l.b16 %v83
  %v164 = vunpack.c.l.b16 %v84
  %v165 = vunpack.c.l.b16 %v85
  %v166 = vunpack.c.l.b16 %v86
  %v167 = vunpack.c.l.b16 %v87
  %v168 = vunpack.c.l.b16 %v88
  %v169 = vunpack.c.l.b16 %v89
  %v170 = vunpack.c.l.b16 %v90
  %v171 = vunpack.c.l.b16 %v91
  %v172 = vunpack.c.l.b16 %v92
  %v173 = vunpack.c.l.b16 %v93
  %v174 = vunpack.c.l.b16 %v94
  %v175 = vunpack.c.l.b16 %v95
  %v176 = vunpack.c.l.b16 %v96
  %v177 = vunpack.c.l.b16 %v97
  %v178 = vunpack.c.l.b16 %v98
  %v179 = vunpack.c.l.b16 %v99
  %v180 = vunpack.c.l.b16 %v100
  %v181 = vunpack.c.l.b16 %v101
  %v182 = vunpack.c.l.b16 %v102
  %v183 = vunpack.c.l.b16 %v103
  %v184 = vunpack.c.l.b16 %v104
  %v185 = vunpack.c.l.b16 %v105
  %v186 = vunpack.c.l.b16 %v106
  %v187 = vunpack.c.l.b16 %v107
  %v188 = vunpack.c.l.b16 %v108
  %v189 = vunpack.c.l.b16 %v109
  %v190 = vunpack.c.l.b16 %v110
  %v191 = vunpack.c.l.b16 %v111
  %v192 = vunpack.c.l.b16 %v112
  %v193 = vunpack.c.l.b16 %v113
  %v194 = vunpack.c.l.b16 %v114
  %v195 = vpack.c.b16 %v164, %v163
  %v196 = vpack.c.b16 %v166, %v165
  %v197 = vpack.c.b16 %v168, %v167
  %v198 = vpack.c.b16 %v170, %v169
  %v199 = vpack.c.b16 %v172, %v171
  %v200 = vpack.c.b16 %v174, %v173
  %v201 = vpack.c.b16 %v176, %v175
  %v202 = vpack.c.b16 %v178, %v177
  %v203 = vpack.c.b16 %v180, %v179
  %v204 = vpack.c.b16 %v182, %v181
  %v205 = vpack.c.b16 %v184, %v183
  %v206 = vpack.c.b16 %v186, %v185
  %v207 = vpack.c.b16 %v188, %v187
  %v208 = vpack.c.b16 %v190, %v189
  %v209 = vpack.c.b16 %v192, %v191
  %v210 = vpack.c.b16 %v194, %v193
  %v243 = vunpack.c.l.b16 %v115
  %v244 = vunpack.c.l.b16 %v116
  %v245 = vunpack.c.l.b16 %v117
  %v246 = vunpack.c.l.b16 %v118
  %v247 = vunpack.c.l.b16 %v119
  %v248 = vunpack.c.l.b16 %v120
  %v249 = vunpack.c.l.b16 %v121
  %v250 = vunpack.c.l.b16 %v122
  %v251 = vunpack.c.l.b16 %v123
  %v252 = vunpack.c.l.b16 %v124
  %v253 = vunpack.c.l.b16 %v125
  %v254 = vunpack.c.l.b16 %v126
  %v255 = vunpack.c.l.b16 %v127
  %v256 = vunpack.c.l.b16 %v128
  %v257 = vunpack.c.l.b16 %v129
  %v258 = vunpack.c.l.b16 %v130
  %v259 = vpack.c.b16 %v244, %v243
  %v260 = vpack.c.b16 %v246, %v245
  %v261 = vpack.c.b16 %v248, %v247
  %v262 = vpack.c.b16 %v250, %v249
  %v263 = vpack.c.b16 %v252, %v251
  %v264 = vpack.c.b16 %v254, %v253
  %v265 = vpack.c.b16 %v256, %v255
  %v266 = vpack.c.b16 %v258, %v257
  %275 = vmatprep.subr.bf16.mxu0 0
  %276 = vmatpush1.bf16.msra.mxu0 %v266
  %277 = vmatprep.subr.bf16.mxu0 0
  %278 = vmatpush1.bf16.msra.mxu0 %v265
  %279 = vmatprep.subr.bf16.mxu0 0
  %280 = vmatpush1.bf16.msra.mxu0 %v264
  %281 = vmatprep.subr.bf16.mxu0 0
  %282 = vmatpush1.bf16.msra.mxu0 %v263
  %283 = vmatprep.subr.bf16.mxu0 0
  %284 = vmatpush1.bf16.msra.mxu0 %v262
  %285 = vmatprep.subr.bf16.mxu0 0
  %286 = vmatpush1.bf16.msra.mxu0 %v261
  %287 = vmatprep.subr.bf16.mxu0 0
  %288 = vmatpush1.bf16.msra.mxu0 %v260
  %289 = vmatprep.subr.bf16.mxu0 0
  %290 = vmatpush1.bf16.msra.mxu0 %v259
  %291 = vmatprep.subr.bf16.mxu0 0
  %292 = vmatpush2.bf16.msra.mxu0 0
  %293 = vmatprep.subr.bf16.mxu0 0
  %294 = vmatpush2.bf16.msra.mxu0 0
  %295 = vmatprep.subr.bf16.mxu0 0
  %296 = vmatpush2.bf16.msra.mxu0 0
  %297 = vmatprep.subr.bf16.mxu0 0
  %298 = vmatpush2.bf16.msra.mxu0 0
  %299 = vmatprep.subr.bf16.mxu0 0
  %300 = vmatpush2.bf16.msra.mxu0 0
  %301 = vmatprep.subr.bf16.mxu0 0
  %302 = vmatpush2.bf16.msra.mxu0 0
  %303 = vmatprep.subr.bf16.mxu0 0
  %304 = vmatpush2.bf16.msra.mxu0 0
  %305 = vmatprep.subr.bf16.mxu0 0
  %306 = vmatpush2.bf16.msra.mxu0 0
  %307 = vmatprep.mubr.bf16.mxu0 0
  %308 = vmatmul.mubr.bf16.gmra.mxu0 %v195
  %v309 = vpop.f32.mrf.mxu0
  %v310 = vadd.f32 0.0, %v309
  %v311 = vpop.f32.mrf.mxu0
  %v312 = vpop.f32.mrf.mxu0
  %v313 = vadd.f32 0.0, %v312
  %v314 = vpop.f32.mrf.mxu0
  %315 = vmatprep.mubr.bf16.mxu0 0
  %316 = vmatmul.mubr.bf16.gmra.mxu0 %v196
  %v317 = vpop.f32.mrf.mxu0
  %v318 = vadd.f32 0.0, %v317
  %v319 = vpop.f32.mrf.mxu0
  %v320 = vpop.f32.mrf.mxu0
  %v321 = vadd.f32 0.0, %v320
  %v322 = vpop.f32.mrf.mxu0
  %323 = vmatprep.mubr.bf16.mxu0 0
  %324 = vmatmul.mubr.bf16.gmra.mxu0 %v197
  %v325 = vpop.f32.mrf.mxu0
  %v326 = vadd.f32 0.0, %v325
  %v327 = vpop.f32.mrf.mxu0
  %v328 = vpop.f32.mrf.mxu0
  %v329 = vadd.f32 0.0, %v328
  %v330 = vpop.f32.mrf.mxu0
  %331 = vmatprep.mubr.bf16.mxu0 0
  %332 = vmatmul.mubr.bf16.gmra.mxu0 %v198
  %v333 = vpop.f32.mrf.mxu0
  %v334 = vadd.f32 0.0, %v333
  %v335 = vpop.f32.mrf.mxu0
  %v336 = vpop.f32.mrf.mxu0
  %v337 = vadd.f32 0.0, %v336
  %v338 = vpop.f32.mrf.mxu0
  %339 = vmatprep.mubr.bf16.mxu0 0
  %340 = vmatmul.mubr.bf16.gmra.mxu0 %v199
  %v341 = vpop.f32.mrf.mxu0
  %v342 = vadd.f32 0.0, %v341
  %v343 = vpop.f32.mrf.mxu0
  %v344 = vpop.f32.mrf.mxu0
  %v345 = vadd.f32 0.0, %v344
  %v346 = vpop.f32.mrf.mxu0
  %347 = vmatprep.mubr.bf16.mxu0 0
  %348 = vmatmul.mubr.bf16.gmra.mxu0 %v200
  %v349 = vpop.f32.mrf.mxu0
  %v350 = vadd.f32 0.0, %v349
  %v351 = vpop.f32.mrf.mxu0
  %v352 = vpop.f32.mrf.mxu0
  %v353 = vadd.f32 0.0, %v352
  %v354 = vpop.f32.mrf.mxu0
  %355 = vmatprep.mubr.bf16.mxu0 0
  %356 = vmatmul.mubr.bf16.gmra.mxu0 %v201
  %v357 = vpop.f32.mrf.mxu0
  %v358 = vadd.f32 0.0, %v357
  %v359 = vpop.f32.mrf.mxu0
  %v360 = vpop.f32.mrf.mxu0
  %v361 = vadd.f32 0.0, %v360
  %v362 = vpop.f32.mrf.mxu0
  %363 = vmatprep.mubr.bf16.mxu0 0
  %364 = vmatmul.mubr.bf16.gmra.mxu0 %v202
  %v365 = vpop.f32.mrf.mxu0
  %v366 = vadd.f32 0.0, %v365
  %v367 = vpop.f32.mrf.mxu0
  %v368 = vpop.f32.mrf.mxu0
  %v369 = vadd.f32 0.0, %v368
  %v370 = vpop.f32.mrf.mxu0
  %371 = vmatprep.mubr.bf16.mxu0 0
  %372 = vmatmul.mubr.bf16.gmra.mxu0 %v203
  %v373 = vpop.f32.mrf.mxu0
  %v374 = vadd.f32 0.0, %v373
  %v375 = vpop.f32.mrf.mxu0
  %v376 = vpop.f32.mrf.mxu0
  %v377 = vadd.f32 0.0, %v376
  %v378 = vpop.f32.mrf.mxu0
  %379 = vmatprep.mubr.bf16.mxu0 0
  %380 = vmatmul.mubr.bf16.gmra.mxu0 %v204
  %v381 = vpop.f32.mrf.mxu0
  %v382 = vadd.f32 0.0, %v381
  %v383 = vpop.f32.mrf.mxu0
  %v384 = vpop.f32.mrf.mxu0
  %v385 = vadd.f32 0.0, %v384
  %v386 = vpop.f32.mrf.mxu0
  %387 = vmatprep.mubr.bf16.mxu0 0
  %388 = vmatmul.mubr.bf16.gmra.mxu0 %v205
  %v389 = vpop.f32.mrf.mxu0
  %v390 = vadd.f32 0.0, %v389
  %v391 = vpop.f32.mrf.mxu0
  %v392 = vpop.f32.mrf.mxu0
  %v393 = vadd.f32 0.0, %v392
  %v394 = vpop.f32.mrf.mxu0
  %395 = vmatprep.mubr.bf16.mxu0 0
  %396 = vmatmul.mubr.bf16.gmra.mxu0 %v206
  %v397 = vpop.f32.mrf.mxu0
  %v398 = vadd.f32 0.0, %v397
  %v399 = vpop.f32.mrf.mxu0
  %v400 = vpop.f32.mrf.mxu0
  %v401 = vadd.f32 0.0, %v400
  %v402 = vpop.f32.mrf.mxu0
  %403 = vmatprep.mubr.bf16.mxu0 0
  %404 = vmatmul.mubr.bf16.gmra.mxu0 %v207
  %v405 = vpop.f32.mrf.mxu0
  %v406 = vadd.f32 0.0, %v405
  %v407 = vpop.f32.mrf.mxu0
  %v408 = vpop.f32.mrf.mxu0
  %v409 = vadd.f32 0.0, %v408
  %v410 = vpop.f32.mrf.mxu0
  %411 = vmatprep.mubr.bf16.mxu0 0
  %412 = vmatmul.mubr.bf16.gmra.mxu0 %v208
  %v413 = vpop.f32.mrf.mxu0
  %v414 = vadd.f32 0.0, %v413
  %v415 = vpop.f32.mrf.mxu0
  %v416 = vpop.f32.mrf.mxu0
  %v417 = vadd.f32 0.0, %v416
  %v418 = vpop.f32.mrf.mxu0
  %419 = vmatprep.mubr.bf16.mxu0 0
  %420 = vmatmul.mubr.bf16.gmra.mxu0 %v209
  %v421 = vpop.f32.mrf.mxu0
  %v422 = vadd.f32 0.0, %v421
  %v423 = vpop.f32.mrf.mxu0
  %v424 = vpop.f32.mrf.mxu0
  %v425 = vadd.f32 0.0, %v424
  %v426 = vpop.f32.mrf.mxu0
  %427 = vmatprep.mubr.bf16.mxu0 0
  %428 = vmatmul.mubr.bf16.gmra.mxu0 %v210
  %v429 = vpop.f32.mrf.mxu0
  %v430 = vadd.f32 0.0, %v429
  %v431 = vpop.f32.mrf.mxu0
  %v432 = vpop.f32.mrf.mxu0
  %v433 = vadd.f32 0.0, %v432
  %v434 = vpop.f32.mrf.mxu0
  %435 = vdwg.mxu0
  %v436 = vadd.f32 %v51, %v310
  %v437 = vadd.f32 %v52, %v313
  %v438 = vadd.f32 %v53, %v318
  %v439 = vadd.f32 %v54, %v321
  %v440 = vadd.f32 %v55, %v326
  %v441 = vadd.f32 %v56, %v329
  %v442 = vadd.f32 %v57, %v334
  %v443 = vadd.f32 %v58, %v337
  %v444 = vadd.f32 %v59, %v342
  %v445 = vadd.f32 %v60, %v345
  %v446 = vadd.f32 %v61, %v350
  %v447 = vadd.f32 %v62, %v353
  %v448 = vadd.f32 %v63, %v358
  %v449 = vadd.f32 %v64, %v361
  %v450 = vadd.f32 %v65, %v366
  %v451 = vadd.f32 %v66, %v369
  %v452 = vadd.f32 %v67, %v374
  %v453 = vadd.f32 %v68, %v377
  %v454 = vadd.f32 %v69, %v382
  %v455 = vadd.f32 %v70, %v385
  %v456 = vadd.f32 %v71, %v390
  %v457 = vadd.f32 %v72, %v393
  %v458 = vadd.f32 %v73, %v398
  %v459 = vadd.f32 %v74, %v401
  %v460 = vadd.f32 %v75, %v406
  %v461 = vadd.f32 %v76, %v409
  %v462 = vadd.f32 %v77, %v414
  %v463 = vadd.f32 %v78, %v417
  %v464 = vadd.f32 %v79, %v422
  %v465 = vadd.f32 %v80, %v425
  %v466 = vadd.f32 %v81, %v430
  %v467 = vadd.f32 %v82, %v433
  %468 = vst [vmem:[#allocation2] sm:$0xff] %v436
  %469 = vst [vmem:[#allocation2 + $0x8] sm:$0xff] %v437
  %470 = vst [vmem:[#allocation2 + $0x10] sm:$0xff] %v438
  %471 = vst [vmem:[#allocation2 + $0x18] sm:$0xff] %v439
  %472 = vst [vmem:[#allocation2 + $0x20] sm:$0xff] %v440
  %473 = vst [vmem:[#allocation2 + $0x28] sm:$0xff] %v441
  %474 = vst [vmem:[#allocation2 + $0x30] sm:$0xff] %v442
  %475 = vst [vmem:[#allocation2 + $0x38] sm:$0xff] %v443
  %476 = vst [vmem:[#allocation2 + $0x40] sm:$0xff] %v444
  %477 = vst [vmem:[#allocation2 + $0x48] sm:$0xff] %v445
  %478 = vst [vmem:[#allocation2 + $0x50] sm:$0xff] %v446
  %479 = vst [vmem:[#allocation2 + $0x58] sm:$0xff] %v447
  %480 = vst [vmem:[#allocation2 + $0x60] sm:$0xff] %v448
  %481 = vst [vmem:[#allocation2 + $0x68] sm:$0xff] %v449
  %482 = vst [vmem:[#allocation2 + $0x70] sm:$0xff] %v450
  %483 = vst [vmem:[#allocation2 + $0x78] sm:$0xff] %v451
  %484 = vst [vmem:[#allocation2 + $0x80] sm:$0xff] %v452
  %485 = vst [vmem:[#allocation2 + $0x88] sm:$0xff] %v453
  %486 = vst [vmem:[#allocation2 + $0x90] sm:$0xff] %v454
  %487 = vst [vmem:[#allocation2 + $0x98] sm:$0xff] %v455
  %488 = vst [vmem:[#allocation2 + $0xa0] sm:$0xff] %v456
  %489 = vst [vmem:[#allocation2 + $0xa8] sm:$0xff] %v457
  %490 = vst [vmem:[#allocation2 + $0xb0] sm:$0xff] %v458
  %491 = vst [vmem:[#allocation2 + $0xb8] sm:$0xff] %v459
  %492 = vst [vmem:[#allocation2 + $0xc0] sm:$0xff] %v460
  %493 = vst [vmem:[#allocation2 + $0xc8] sm:$0xff] %v461
  %494 = vst [vmem:[#allocation2 + $0xd0] sm:$0xff] %v462
  %495 = vst [vmem:[#allocation2 + $0xd8] sm:$0xff] %v463
  %496 = vst [vmem:[#allocation2 + $0xe0] sm:$0xff] %v464
  %497 = vst [vmem:[#allocation2 + $0xe8] sm:$0xff] %v465
  %498 = vst [vmem:[#allocation2 + $0xf0] sm:$0xff] %v466
  %499 = vst [vmem:[#allocation2 + $0xf8] sm:$0xff] %v467
  // Predicated region
  $region18: #{_gcn_forward_impl.5} parent=0 // pred_check
    %p500 = pneg %p15
  $region19: #{_gcn_forward_impl.5} parent=0 // pred_check_branch
    %502 = sbr.rel (%p500) target = $region21
  $region20: #{_gcn_forward_impl.5} parent=0 // pred_region
    %v503 = vld [vmem:[#allocation2] sm:$0xff]
    %v504 = vld [vmem:[#allocation2 + $0x8] sm:$0xff]
    %v505 = vld [vmem:[#allocation2 + $0x10] sm:$0xff]
    %v506 = vld [vmem:[#allocation2 + $0x18] sm:$0xff]
    %v507 = vld [vmem:[#allocation2 + $0x20] sm:$0xff]
    %v508 = vld [vmem:[#allocation2 + $0x28] sm:$0xff]
    %v509 = vld [vmem:[#allocation2 + $0x30] sm:$0xff]
    %v510 = vld [vmem:[#allocation2 + $0x38] sm:$0xff]
    %v511 = vld [vmem:[#allocation2 + $0x40] sm:$0xff]
    %v512 = vld [vmem:[#allocation2 + $0x48] sm:$0xff]
    %v513 = vld [vmem:[#allocation2 + $0x50] sm:$0xff]
    %v514 = vld [vmem:[#allocation2 + $0x58] sm:$0xff]
    %v515 = vld [vmem:[#allocation2 + $0x60] sm:$0xff]
    %v516 = vld [vmem:[#allocation2 + $0x68] sm:$0xff]
    %v517 = vld [vmem:[#allocation2 + $0x70] sm:$0xff]
    %v518 = vld [vmem:[#allocation2 + $0x78] sm:$0xff]
    %v519 = vld [vmem:[#allocation2 + $0x80] sm:$0xff]
    %v520 = vld [vmem:[#allocation2 + $0x88] sm:$0xff]
    %v521 = vld [vmem:[#allocation2 + $0x90] sm:$0xff]
    %v522 = vld [vmem:[#allocation2 + $0x98] sm:$0xff]
    %v523 = vld [vmem:[#allocation2 + $0xa0] sm:$0xff]
    %v524 = vld [vmem:[#allocation2 + $0xa8] sm:$0xff]
    %v525 = vld [vmem:[#allocation2 + $0xb0] sm:$0xff]
    %v526 = vld [vmem:[#allocation2 + $0xb8] sm:$0xff]
    %v527 = vld [vmem:[#allocation2 + $0xc0] sm:$0xff]
    %v528 = vld [vmem:[#allocation2 + $0xc8] sm:$0xff]
    %v529 = vld [vmem:[#allocation2 + $0xd0] sm:$0xff]
    %v530 = vld [vmem:[#allocation2 + $0xd8] sm:$0xff]
    %v531 = vld [vmem:[#allocation2 + $0xe0] sm:$0xff]
    %v532 = vld [vmem:[#allocation2 + $0xe8] sm:$0xff]
    %v533 = vld [vmem:[#allocation2 + $0xf0] sm:$0xff]
    %v534 = vld [vmem:[#allocation2 + $0xf8] sm:$0xff]
    %v535 = vpack.c.bf16 %v504, %v503
    %v536 = vpack.c.bf16 %v506, %v505
    %v537 = vpack.c.bf16 %v508, %v507
    %v538 = vpack.c.bf16 %v510, %v509
    %v539 = vpack.c.bf16 %v512, %v511
    %v540 = vpack.c.bf16 %v514, %v513
    %v541 = vpack.c.bf16 %v516, %v515
    %v542 = vpack.c.bf16 %v518, %v517
    %v543 = vpack.c.bf16 %v520, %v519
    %v544 = vpack.c.bf16 %v522, %v521
    %v545 = vpack.c.bf16 %v524, %v523
    %v546 = vpack.c.bf16 %v526, %v525
    %v547 = vpack.c.bf16 %v528, %v527
    %v548 = vpack.c.bf16 %v530, %v529
    %v549 = vpack.c.bf16 %v532, %v531
    %v550 = vpack.c.bf16 %v534, %v533
    %v567 = vunpack.c.l.b16 %v535
    %v568 = vunpack.c.h.b16 %v535
    %v569 = vunpack.c.l.b16 %v536
    %v570 = vunpack.c.h.b16 %v536
    %v571 = vunpack.c.l.b16 %v537
    %v572 = vunpack.c.h.b16 %v537
    %v573 = vunpack.c.l.b16 %v538
    %v574 = vunpack.c.h.b16 %v538
    %v575 = vunpack.c.l.b16 %v539
    %v576 = vunpack.c.h.b16 %v539
    %v577 = vunpack.c.l.b16 %v540
    %v578 = vunpack.c.h.b16 %v540
    %v579 = vunpack.c.l.b16 %v541
    %v580 = vunpack.c.h.b16 %v541
    %v581 = vunpack.c.l.b16 %v542
    %v582 = vunpack.c.h.b16 %v542
    %v583 = vunpack.c.l.b16 %v543
    %v584 = vunpack.c.h.b16 %v543
    %v585 = vunpack.c.l.b16 %v544
    %v586 = vunpack.c.h.b16 %v544
    %v587 = vunpack.c.l.b16 %v545
    %v588 = vunpack.c.h.b16 %v545
    %v589 = vunpack.c.l.b16 %v546
    %v590 = vunpack.c.h.b16 %v546
    %v591 = vunpack.c.l.b16 %v547
    %v592 = vunpack.c.h.b16 %v547
    %v593 = vunpack.c.l.b16 %v548
    %v594 = vunpack.c.h.b16 %v548
    %v595 = vunpack.c.l.b16 %v549
    %v596 = vunpack.c.h.b16 %v549
    %v597 = vunpack.c.l.b16 %v550
    %v598 = vunpack.c.h.b16 %v550
    %v599 = vpack.c.b16 %v567, %v567
    %v600 = vpack.c.b16 %v568, %v568
    %v601 = vpack.c.b16 %v569, %v569
    %v602 = vpack.c.b16 %v570, %v570
    %v603 = vpack.c.b16 %v571, %v571
    %v604 = vpack.c.b16 %v572, %v572
    %v605 = vpack.c.b16 %v573, %v573
    %v606 = vpack.c.b16 %v574, %v574
    %v607 = vpack.c.b16 %v575, %v575
    %v608 = vpack.c.b16 %v576, %v576
    %v609 = vpack.c.b16 %v577, %v577
    %v610 = vpack.c.b16 %v578, %v578
    %v611 = vpack.c.b16 %v579, %v579
    %v612 = vpack.c.b16 %v580, %v580
    %v613 = vpack.c.b16 %v581, %v581
    %v614 = vpack.c.b16 %v582, %v582
    %v615 = vpack.c.b16 %v583, %v583
    %v616 = vpack.c.b16 %v584, %v584
    %v617 = vpack.c.b16 %v585, %v585
    %v618 = vpack.c.b16 %v586, %v586
    %v619 = vpack.c.b16 %v587, %v587
    %v620 = vpack.c.b16 %v588, %v588
    %v621 = vpack.c.b16 %v589, %v589
    %v622 = vpack.c.b16 %v590, %v590
    %v623 = vpack.c.b16 %v591, %v591
    %v624 = vpack.c.b16 %v592, %v592
    %v625 = vpack.c.b16 %v593, %v593
    %v626 = vpack.c.b16 %v594, %v594
    %v627 = vpack.c.b16 %v595, %v595
    %v628 = vpack.c.b16 %v596, %v596
    %v629 = vpack.c.b16 %v597, %v597
    %v630 = vpack.c.b16 %v598, %v598
    %663 = vst [vmem:[%s3] sm:$0xf] %v599
    %664 = vst [vmem:[%s3 + $0x4] sm:$0xf] %v600
    %665 = vst [vmem:[%s3 + $0x8] sm:$0xf] %v601
    %666 = vst [vmem:[%s3 + $0xc] sm:$0xf] %v602
    %667 = vst [vmem:[%s3 + $0x10] sm:$0xf] %v603
    %668 = vst [vmem:[%s3 + $0x14] sm:$0xf] %v604
    %669 = vst [vmem:[%s3 + $0x18] sm:$0xf] %v605
    %670 = vst [vmem:[%s3 + $0x1c] sm:$0xf] %v606
    %671 = vst [vmem:[%s3 + $0x20] sm:$0xf] %v607
    %672 = vst [vmem:[%s3 + $0x24] sm:$0xf] %v608
    %673 = vst [vmem:[%s3 + $0x28] sm:$0xf] %v609
    %674 = vst [vmem:[%s3 + $0x2c] sm:$0xf] %v610
    %675 = vst [vmem:[%s3 + $0x30] sm:$0xf] %v611
    %676 = vst [vmem:[%s3 + $0x34] sm:$0xf] %v612
    %677 = vst [vmem:[%s3 + $0x38] sm:$0xf] %v613
    %678 = vst [vmem:[%s3 + $0x3c] sm:$0xf] %v614
    %679 = vst [vmem:[%s3 + $0x40] sm:$0xf] %v615
    %680 = vst [vmem:[%s3 + $0x44] sm:$0xf] %v616
    %681 = vst [vmem:[%s3 + $0x48] sm:$0xf] %v617
    %682 = vst [vmem:[%s3 + $0x4c] sm:$0xf] %v618
    %683 = vst [vmem:[%s3 + $0x50] sm:$0xf] %v619
    %684 = vst [vmem:[%s3 + $0x54] sm:$0xf] %v620
    %685 = vst [vmem:[%s3 + $0x58] sm:$0xf] %v621
    %686 = vst [vmem:[%s3 + $0x5c] sm:$0xf] %v622
    %687 = vst [vmem:[%s3 + $0x60] sm:$0xf] %v623
    %688 = vst [vmem:[%s3 + $0x64] sm:$0xf] %v624
    %689 = vst [vmem:[%s3 + $0x68] sm:$0xf] %v625
    %690 = vst [vmem:[%s3 + $0x6c] sm:$0xf] %v626
    %691 = vst [vmem:[%s3 + $0x70] sm:$0xf] %v627
    %692 = vst [vmem:[%s3 + $0x74] sm:$0xf] %v628
    %693 = vst [vmem:[%s3 + $0x78] sm:$0xf] %v629
    %694 = vst [vmem:[%s3 + $0x7c] sm:$0xf] %v630
  $region21: #{_gcn_forward_impl.5} parent=0 // pred_fallthru
    _
  // Predicated region
  $region22: #{_gcn_forward_impl.5} parent=0 // pred_check
    _
  $region23: #{_gcn_forward_impl.5} parent=0 // pred_check_branch
    %696 = sbr.rel (0) target = $region25
  $region24: #{_gcn_forward_impl.5} parent=0 // pred_region
    _
  $region25: #{_gcn_forward_impl.5} parent=0 // pred_fallthru
    _
  // Predicated region
  $region26: #{_gcn_forward_impl.5} parent=0 // pred_check
    _
  $region27: #{_gcn_forward_impl.5} parent=0 // pred_check_branch
    %698 = sbr.rel (0) target = $region29
  $region28: #{_gcn_forward_impl.5} parent=0 // pred_region
    _
  $region29: #{_gcn_forward_impl.5} parent=0 // pred_fallthru
    _

// kernel: _gcn_forward_impl.9
$region0: #{_gcn_forward_impl.9}
  #allocation0 [shape = 'u32[]', space=smem, size = 0x4, offset = 0x4, fixed_abs, tag = 'smem constant byte address 0x4 - core index']
  #allocation1 [shape = 'u32[144,128]{1,0:T(1,128)}', space=vmem, size = 0x12000, scoped, tag = 'internal scratch']
  %s0 = inlined_call_operand.vmem [shape: s32[8], index: 0, kind: input, shape index: {}]
  %s1 = inlined_call_operand.vmem [shape: s32[8], index: 1, kind: input, shape index: {}]
  %s2 = inlined_call_operand.vmem [shape: f32[256,128], index: 2, kind: input, shape index: {}]
  %s3 = inlined_call_operand.vmem [shape: f32[8,128], index: 3, kind: output, shape index: {}]
  %s4 = sld [smem:[#allocation0]]
  $region30: #{_gcn_forward_impl.9} parent=0
    _
  %s6 = ssub.s32 1, %s4
  %s7 = scalar_select 0, %s6, %s4
  $region1: #{_gcn_forward_impl.9} parent=0
    #allocation2 [shape = 'u8[512]{0}', space=smem, size = 0x200, scoped, tag = 'input window, operand 0, single buffered']
    #allocation3 [shape = 's32[1]{0}', space=sflag, size = 0x4, scoped, tag = 'scoped memory for _gcn_forward_impl.9']
    #allocation4 [shape = 'u8[512]{0}', space=smem, size = 0x200, scoped, tag = 'input window, operand 1, single buffered']
    #allocation5 [shape = 's32[1]{0}', space=sflag, size = 0x4, scoped, tag = 'scoped memory for _gcn_forward_impl.9']
    %8 = vsyncpa [#allocation3], 0
    %9 = vsyncpa [#allocation5], 0
    // Predicated region
    $region2: #{_gcn_forward_impl.9} parent=1 // pred_check
      _
    $region3: #{_gcn_forward_impl.9} parent=1 // pred_check_branch
      %11 = sbr.rel (0) target = $region5
    $region4: #{_gcn_forward_impl.9} parent=1 // pred_region
      %s13 = ssub.s32 16, 16
      %14 = vsyncadd [#allocation3], %s13
      %s16 = sshll.u32 %s0, 4
      %s17 = int_to_ptr.vmem [resolvable:$true] %s16
      %19 = dma.vmem_to_smem %s17, 16, [#allocation2], [#allocation3]
    $region5: #{_gcn_forward_impl.9} parent=1 // pred_fallthru
      _
    // Predicated region
    $region6: #{_gcn_forward_impl.9} parent=1 // pred_check
      _
    $region7: #{_gcn_forward_impl.9} parent=1 // pred_check_branch
      %21 = sbr.rel (0) target = $region9
    $region8: #{_gcn_forward_impl.9} parent=1 // pred_region
      %s23 = ssub.s32 16, 16
      %24 = vsyncadd [#allocation5], %s23
      %s26 = sshll.u32 %s1, 4
      %s27 = int_to_ptr.vmem [resolvable:$true] %s26
      %29 = dma.vmem_to_smem %s27, 16, [#allocation4], [#allocation5]
    $region9: #{_gcn_forward_impl.9} parent=1 // pred_fallthru
      _
    // Predicated region
    $region10: #{_gcn_forward_impl.9} parent=1 // pred_check
      _
    $region11: #{_gcn_forward_impl.9} parent=1 // pred_check_branch
      %31 = sbr.rel (0) target = $region13
    $region12: #{_gcn_forward_impl.9} parent=1 // pred_region
      _
    $region13: #{_gcn_forward_impl.9} parent=1 // pred_fallthru
      _
    // Predicated region
    $region14: #{_gcn_forward_impl.9} parent=1 // pred_check
      _
    $region15: #{_gcn_forward_impl.9} parent=1 // pred_check_branch
      %33 = sbr.rel (0) target = $region17
    $region16: #{_gcn_forward_impl.9} parent=1 // pred_region
      %34 = dma.done [#allocation3], 16
    $region17: #{_gcn_forward_impl.9} parent=1 // pred_fallthru
      _
    // Predicated region
    $region18: #{_gcn_forward_impl.9} parent=1 // pred_check
      _
    $region19: #{_gcn_forward_impl.9} parent=1 // pred_check_branch
      %36 = sbr.rel (0) target = $region21
    $region20: #{_gcn_forward_impl.9} parent=1 // pred_region
      %37 = dma.done [#allocation5], 16
    $region21: #{_gcn_forward_impl.9} parent=1 // pred_fallthru
      _
    %38 = sfence
    %s39 = sld [smem:[#allocation2]]
    %s40 = sld [smem:[#allocation4]]
    %s41 = scalar_lea.vmem %s2, %s39
    %v42 = vld [vmem:[%s41] sm:$0x1]
    %s43 = scalar_lea.vmem %s2, %s40
    %v44 = vld [vmem:[%s43] sm:$0x1]
    %v45 = vmul.f32 %v42, %v44
    %vm46 = vcmask 1040384
    %v47 = vsel %vm46, %v45, 0.0
    %48 = vadd.xlane.f32.xlu0 %v47
    %v49 = vpop.xlane.xlu0 %48
    %50 = vst [vmem:[%s3] sm:$0x1] %v49
    %s51 = sld [smem:[#allocation2 + $0x1]]
    %s52 = sld [smem:[#allocation4 + $0x1]]
    %s53 = scalar_lea.vmem %s2, %s51
    %v54 = vld [vmem:[%s53] sm:$0x1]
    %s55 = scalar_lea.vmem %s2, %s52
    %v56 = vld [vmem:[%s55] sm:$0x1]
    %v57 = vmul.f32 %v54, %v56
    %v58 = vsel %vm46, %v57, 0.0
    %59 = vadd.xlane.f32.xlu0 %v58
    %v60 = vpop.xlane.xlu0 %59
    %61 = vst [vmem:[%s3 + $0x1] sm:$0x1] %v60
    %s62 = sld [smem:[#allocation2 + $0x2]]
    %s63 = sld [smem:[#allocation4 + $0x2]]
    %s64 = scalar_lea.vmem %s2, %s62
    %v65 = vld [vmem:[%s64] sm:$0x1]
    %s66 = scalar_lea.vmem %s2, %s63
    %v67 = vld [vmem:[%s66] sm:$0x1]
    %v68 = vmul.f32 %v65, %v67
    %v69 = vsel %vm46, %v68, 0.0
    %70 = vadd.xlane.f32.xlu0 %v69
    %v71 = vpop.xlane.xlu0 %70
    %72 = vst [vmem:[%s3 + $0x2] sm:$0x1] %v71
    %s73 = sld [smem:[#allocation2 + $0x3]]
    %s74 = sld [smem:[#allocation4 + $0x3]]
    %s75 = scalar_lea.vmem %s2, %s73
    %v76 = vld [vmem:[%s75] sm:$0x1]
    %s77 = scalar_lea.vmem %s2, %s74
    %v78 = vld [vmem:[%s77] sm:$0x1]
    %v79 = vmul.f32 %v76, %v78
    %v80 = vsel %vm46, %v79, 0.0
    %81 = vadd.xlane.f32.xlu0 %v80
    %v82 = vpop.xlane.xlu0 %81
    %83 = vst [vmem:[%s3 + $0x3] sm:$0x1] %v82
    %s84 = sld [smem:[#allocation2 + $0x4]]
    %s85 = sld [smem:[#allocation4 + $0x4]]
    %s86 = scalar_lea.vmem %s2, %s84
    %v87 = vld [vmem:[%s86] sm:$0x1]
    %s88 = scalar_lea.vmem %s2, %s85
    %v89 = vld [vmem:[%s88] sm:$0x1]
    %v90 = vmul.f32 %v87, %v89
    %v91 = vsel %vm46, %v90, 0.0
    %92 = vadd.xlane.f32.xlu0 %v91
    %v93 = vpop.xlane.xlu0 %92
    %94 = vst [vmem:[%s3 + $0x4] sm:$0x1] %v93
    %s95 = sld [smem:[#allocation2 + $0x5]]
    %s96 = sld [smem:[#allocation4 + $0x5]]
    %s97 = scalar_lea.vmem %s2, %s95
    %v98 = vld [vmem:[%s97] sm:$0x1]
    %s99 = scalar_lea.vmem %s2, %s96
    %v100 = vld [vmem:[%s99] sm:$0x1]
    %v101 = vmul.f32 %v98, %v100
    %v102 = vsel %vm46, %v101, 0.0
    %103 = vadd.xlane.f32.xlu0 %v102
    %v104 = vpop.xlane.xlu0 %103
    %105 = vst [vmem:[%s3 + $0x5] sm:$0x1] %v104
    %s106 = sld [smem:[#allocation2 + $0x6]]
    %s107 = sld [smem:[#allocation4 + $0x6]]
    %s108 = scalar_lea.vmem %s2, %s106
    %v109 = vld [vmem:[%s108] sm:$0x1]
    %s110 = scalar_lea.vmem %s2, %s107
    %v111 = vld [vmem:[%s110] sm:$0x1]
    %v112 = vmul.f32 %v109, %v111
    %v113 = vsel %vm46, %v112, 0.0
    %114 = vadd.xlane.f32.xlu0 %v113
    %v115 = vpop.xlane.xlu0 %114
    %116 = vst [vmem:[%s3 + $0x6] sm:$0x1] %v115
    %s117 = sld [smem:[#allocation2 + $0x7]]
    %s118 = sld [smem:[#allocation4 + $0x7]]
    %s119 = scalar_lea.vmem %s2, %s117
    %v120 = vld [vmem:[%s119] sm:$0x1]
    %s121 = scalar_lea.vmem %s2, %s118
    %v122 = vld [vmem:[%s121] sm:$0x1]
    %v123 = vmul.f32 %v120, %v122
    %v124 = vsel %vm46, %v123, 0.0
    %125 = vadd.xlane.f32.xlu0 %v124
    %v126 = vpop.xlane.xlu0 %125
    %127 = vst [vmem:[%s3 + $0x7] sm:$0x1] %v126
    // Predicated region
    $region22: #{_gcn_forward_impl.9} parent=1 // pred_check
      _
    $region23: #{_gcn_forward_impl.9} parent=1 // pred_check_branch
      %129 = sbr.rel (0) target = $region25
    $region24: #{_gcn_forward_impl.9} parent=1 // pred_region
      _
    $region25: #{_gcn_forward_impl.9} parent=1 // pred_fallthru
      _
    // Predicated region
    $region26: #{_gcn_forward_impl.9} parent=1 // pred_check
      _
    $region27: #{_gcn_forward_impl.9} parent=1 // pred_check_branch
      %131 = sbr.rel (0) target = $region29
    $region28: #{_gcn_forward_impl.9} parent=1 // pred_region
      _
    $region29: #{_gcn_forward_impl.9} parent=1 // pred_fallthru
      _
    %132 = vsyncpa [#allocation3], 1
    %133 = vsyncpa [#allocation5], 1

// kernel: _gcn_forward_impl.8
$region0: #{_gcn_forward_impl.8}
  #allocation0 [shape = 'u32[]', space=smem, size = 0x4, offset = 0x4, fixed_abs, tag = 'smem constant byte address 0x4 - core index']
  #allocation1 [shape = 'u32[144,128]{1,0:T(1,128)}', space=vmem, size = 0x12000, scoped, tag = 'internal scratch']
  #allocation2 [shape = 'f32[256,128]{1,0:T(8,128)}', space=vmem, size = 0x20000, scoped, tag = 'scratch operand']
  %s0 = inlined_call_operand.vmem [shape: bf16[256,256], index: 0, kind: input, shape index: {}]
  %s1 = inlined_call_operand.vmem [shape: bf16[256,128], index: 1, kind: input, shape index: {}]
  %s2 = inlined_call_operand.vmem [shape: f32[1,128], index: 2, kind: input, shape index: {}]
  %s3 = inlined_call_operand.vmem [shape: f32[256,128], index: 3, kind: output, shape index: {}]
  %s4 = sld [smem:[#allocation0]]
  $region30: #{_gcn_forward_impl.8} parent=0
    _
  %s6 = ssub.s32 1, %s4
  %s7 = scalar_select 0, %s6, %s4
  // Predicated region
  $region2: #{_gcn_forward_impl.8} parent=0 // pred_check
    _
  $region3: #{_gcn_forward_impl.8} parent=0 // pred_check_branch
    %9 = sbr.rel (0) target = $region5
  $region4: #{_gcn_forward_impl.8} parent=0 // pred_region
    _
  $region5: #{_gcn_forward_impl.8} parent=0 // pred_fallthru
    _
  // Predicated region
  $region6: #{_gcn_forward_impl.8} parent=0 // pred_check
    _
  $region7: #{_gcn_forward_impl.8} parent=0 // pred_check_branch
    %11 = sbr.rel (0) target = $region9
  $region8: #{_gcn_forward_impl.8} parent=0 // pred_region
    _
  $region9: #{_gcn_forward_impl.8} parent=0 // pred_fallthru
    _
  // Predicated region
  $region10: #{_gcn_forward_impl.8} parent=0 // pred_check
    _
  $region11: #{_gcn_forward_impl.8} parent=0 // pred_check_branch
    %13 = sbr.rel (0) target = $region13
  $region12: #{_gcn_forward_impl.8} parent=0 // pred_region
    _
  $region13: #{_gcn_forward_impl.8} parent=0 // pred_fallthru
    _
  %p15 = scmp.eq.s32.totalorder 0, 0
  // Predicated region
  $region14: #{_gcn_forward_impl.8} parent=0 // pred_check
    %p16 = pneg %p15
  $region15: #{_gcn_forward_impl.8} parent=0 // pred_check_branch
    %18 = sbr.rel (%p16) target = $region17
  $region16: #{_gcn_forward_impl.8} parent=0 // pred_region
    %19 = vst [vmem:[#allocation2] sm:$0xff] 0.0
    %20 = vst [vmem:[#allocation2 + $0x8] sm:$0xff] 0.0
    %21 = vst [vmem:[#allocation2 + $0x10] sm:$0xff] 0.0
    %22 = vst [vmem:[#allocation2 + $0x18] sm:$0xff] 0.0
    %23 = vst [vmem:[#allocation2 + $0x20] sm:$0xff] 0.0
    %24 = vst [vmem:[#allocation2 + $0x28] sm:$0xff] 0.0
    %25 = vst [vmem:[#allocation2 + $0x30] sm:$0xff] 0.0
    %26 = vst [vmem:[#allocation2 + $0x38] sm:$0xff] 0.0
    %27 = vst [vmem:[#allocation2 + $0x40] sm:$0xff] 0.0
    %28 = vst [vmem:[#allocation2 + $0x48] sm:$0xff] 0.0
    %29 = vst [vmem:[#allocation2 + $0x50] sm:$0xff] 0.0
    %30 = vst [vmem:[#allocation2 + $0x58] sm:$0xff] 0.0
    %31 = vst [vmem:[#allocation2 + $0x60] sm:$0xff] 0.0
    %32 = vst [vmem:[#allocation2 + $0x68] sm:$0xff] 0.0
    %33 = vst [vmem:[#allocation2 + $0x70] sm:$0xff] 0.0
    %34 = vst [vmem:[#allocation2 + $0x78] sm:$0xff] 0.0
    %35 = vst [vmem:[#allocation2 + $0x80] sm:$0xff] 0.0
    %36 = vst [vmem:[#allocation2 + $0x88] sm:$0xff] 0.0
    %37 = vst [vmem:[#allocation2 + $0x90] sm:$0xff] 0.0
    %38 = vst [vmem:[#allocation2 + $0x98] sm:$0xff] 0.0
    %39 = vst [vmem:[#allocation2 + $0xa0] sm:$0xff] 0.0
    %40 = vst [vmem:[#allocation2 + $0xa8] sm:$0xff] 0.0
    %41 = vst [vmem:[#allocation2 + $0xb0] sm:$0xff] 0.0
    %42 = vst [vmem:[#allocation2 + $0xb8] sm:$0xff] 0.0
    %43 = vst [vmem:[#allocation2 + $0xc0] sm:$0xff] 0.0
    %44 = vst [vmem:[#allocation2 + $0xc8] sm:$0xff] 0.0
    %45 = vst [vmem:[#allocation2 + $0xd0] sm:$0xff] 0.0
    %46 = vst [vmem:[#allocation2 + $0xd8] sm:$0xff] 0.0
    %47 = vst [vmem:[#allocation2 + $0xe0] sm:$0xff] 0.0
    %48 = vst [vmem:[#allocation2 + $0xe8] sm:$0xff] 0.0
    %49 = vst [vmem:[#allocation2 + $0xf0] sm:$0xff] 0.0
    %50 = vst [vmem:[#allocation2 + $0xf8] sm:$0xff] 0.0
  $region17: #{_gcn_forward_impl.8} parent=0 // pred_fallthru
    _
  %v51 = vld [vmem:[#allocation2] sm:$0xff]
  %v52 = vld [vmem:[#allocation2 + $0x8] sm:$0xff]
  %v53 = vld [vmem:[#allocation2 + $0x10] sm:$0xff]
  %v54 = vld [vmem:[#allocation2 + $0x18] sm:$0xff]
  %v55 = vld [vmem:[#allocation2 + $0x20] sm:$0xff]
  %v56 = vld [vmem:[#allocation2 + $0x28] sm:$0xff]
  %v57 = vld [vmem:[#allocation2 + $0x30] sm:$0xff]
  %v58 = vld [vmem:[#allocation2 + $0x38] sm:$0xff]
  %v59 = vld [vmem:[#allocation2 + $0x40] sm:$0xff]
  %v60 = vld [vmem:[#allocation2 + $0x48] sm:$0xff]
  %v61 = vld [vmem:[#allocation2 + $0x50] sm:$0xff]
  %v62 = vld [vmem:[#allocation2 + $0x58] sm:$0xff]
  %v63 = vld [vmem:[#allocation2 + $0x60] sm:$0xff]
  %v64 = vld [vmem:[#allocation2 + $0x68] sm:$0xff]
  %v65 = vld [vmem:[#allocation2 + $0x70] sm:$0xff]
  %v66 = vld [vmem:[#allocation2 + $0x78] sm:$0xff]
  %v67 = vld [vmem:[#allocation2 + $0x80] sm:$0xff]
  %v68 = vld [vmem:[#allocation2 + $0x88] sm:$0xff]
  %v69 = vld [vmem:[#allocation2 + $0x90] sm:$0xff]
  %v70 = vld [vmem:[#allocation2 + $0x98] sm:$0xff]
  %v71 = vld [vmem:[#allocation2 + $0xa0] sm:$0xff]
  %v72 = vld [vmem:[#allocation2 + $0xa8] sm:$0xff]
  %v73 = vld [vmem:[#allocation2 + $0xb0] sm:$0xff]
  %v74 = vld [vmem:[#allocation2 + $0xb8] sm:$0xff]
  %v75 = vld [vmem:[#allocation2 + $0xc0] sm:$0xff]
  %v76 = vld [vmem:[#allocation2 + $0xc8] sm:$0xff]
  %v77 = vld [vmem:[#allocation2 + $0xd0] sm:$0xff]
  %v78 = vld [vmem:[#allocation2 + $0xd8] sm:$0xff]
  %v79 = vld [vmem:[#allocation2 + $0xe0] sm:$0xff]
  %v80 = vld [vmem:[#allocation2 + $0xe8] sm:$0xff]
  %v81 = vld [vmem:[#allocation2 + $0xf0] sm:$0xff]
  %v82 = vld [vmem:[#allocation2 + $0xf8] sm:$0xff]
  %v83 = vld [vmem:[%s0] sm:$0xff]
  %v84 = vld [vmem:[%s0 + $0x8] sm:$0xff]
  %v85 = vld [vmem:[%s0 + $0x10] sm:$0xff]
  %v86 = vld [vmem:[%s0 + $0x18] sm:$0xff]
  %v87 = vld [vmem:[%s0 + $0x20] sm:$0xff]
  %v88 = vld [vmem:[%s0 + $0x28] sm:$0xff]
  %v89 = vld [vmem:[%s0 + $0x30] sm:$0xff]
  %v90 = vld [vmem:[%s0 + $0x38] sm:$0xff]
  %v91 = vld [vmem:[%s0 + $0x40] sm:$0xff]
  %v92 = vld [vmem:[%s0 + $0x48] sm:$0xff]
  %v93 = vld [vmem:[%s0 + $0x50] sm:$0xff]
  %v94 = vld [vmem:[%s0 + $0x58] sm:$0xff]
  %v95 = vld [vmem:[%s0 + $0x60] sm:$0xff]
  %v96 = vld [vmem:[%s0 + $0x68] sm:$0xff]
  %v97 = vld [vmem:[%s0 + $0x70] sm:$0xff]
  %v98 = vld [vmem:[%s0 + $0x78] sm:$0xff]
  %v99 = vld [vmem:[%s0 + $0x80] sm:$0xff]
  %v100 = vld [vmem:[%s0 + $0x88] sm:$0xff]
  %v101 = vld [vmem:[%s0 + $0x90] sm:$0xff]
  %v102 = vld [vmem:[%s0 + $0x98] sm:$0xff]
  %v103 = vld [vmem:[%s0 + $0xa0] sm:$0xff]
  %v104 = vld [vmem:[%s0 + $0xa8] sm:$0xff]
  %v105 = vld [vmem:[%s0 + $0xb0] sm:$0xff]
  %v106 = vld [vmem:[%s0 + $0xb8] sm:$0xff]
  %v107 = vld [vmem:[%s0 + $0xc0] sm:$0xff]
  %v108 = vld [vmem:[%s0 + $0xc8] sm:$0xff]
  %v109 = vld [vmem:[%s0 + $0xd0] sm:$0xff]
  %v110 = vld [vmem:[%s0 + $0xd8] sm:$0xff]
  %v111 = vld [vmem:[%s0 + $0xe0] sm:$0xff]
  %v112 = vld [vmem:[%s0 + $0xe8] sm:$0xff]
  %v113 = vld [vmem:[%s0 + $0xf0] sm:$0xff]
  %v114 = vld [vmem:[%s0 + $0xf8] sm:$0xff]
  %v115 = vld [vmem:[%s1] sm:$0xf]
  %v116 = vld [vmem:[%s1 + $0x4] sm:$0xf]
  %v117 = vld [vmem:[%s1 + $0x8] sm:$0xf]
  %v118 = vld [vmem:[%s1 + $0xc] sm:$0xf]
  %v119 = vld [vmem:[%s1 + $0x10] sm:$0xf]
  %v120 = vld [vmem:[%s1 + $0x14] sm:$0xf]
  %v121 = vld [vmem:[%s1 + $0x18] sm:$0xf]
  %v122 = vld [vmem:[%s1 + $0x1c] sm:$0xf]
  %v123 = vld [vmem:[%s1 + $0x20] sm:$0xf]
  %v124 = vld [vmem:[%s1 + $0x24] sm:$0xf]
  %v125 = vld [vmem:[%s1 + $0x28] sm:$0xf]
  %v126 = vld [vmem:[%s1 + $0x2c] sm:$0xf]
  %v127 = vld [vmem:[%s1 + $0x30] sm:$0xf]
  %v128 = vld [vmem:[%s1 + $0x34] sm:$0xf]
  %v129 = vld [vmem:[%s1 + $0x38] sm:$0xf]
  %v130 = vld [vmem:[%s1 + $0x3c] sm:$0xf]
  %v131 = vld [vmem:[%s1 + $0x40] sm:$0xf]
  %v132 = vld [vmem:[%s1 + $0x44] sm:$0xf]
  %v133 = vld [vmem:[%s1 + $0x48] sm:$0xf]
  %v134 = vld [vmem:[%s1 + $0x4c] sm:$0xf]
  %v135 = vld [vmem:[%s1 + $0x50] sm:$0xf]
  %v136 = vld [vmem:[%s1 + $0x54] sm:$0xf]
  %v137 = vld [vmem:[%s1 + $0x58] sm:$0xf]
  %v138 = vld [vmem:[%s1 + $0x5c] sm:$0xf]
  %v139 = vld [vmem:[%s1 + $0x60] sm:$0xf]
  %v140 = vld [vmem:[%s1 + $0x64] sm:$0xf]
  %v141 = vld [vmem:[%s1 + $0x68] sm:$0xf]
  %v142 = vld [vmem:[%s1 + $0x6c] sm:$0xf]
  %v143 = vld [vmem:[%s1 + $0x70] sm:$0xf]
  %v144 = vld [vmem:[%s1 + $0x74] sm:$0xf]
  %v145 = vld [vmem:[%s1 + $0x78] sm:$0xf]
  %v146 = vld [vmem:[%s1 + $0x7c] sm:$0xf]
  %v179 = vunpack.c.l.b16 %v83
  %v180 = vunpack.c.h.b16 %v83
  %v181 = vunpack.c.l.b16 %v84
  %v182 = vunpack.c.h.b16 %v84
  %v183 = vunpack.c.l.b16 %v85
  %v184 = vunpack.c.h.b16 %v85
  %v185 = vunpack.c.l.b16 %v86
  %v186 = vunpack.c.h.b16 %v86
  %v187 = vunpack.c.l.b16 %v87
  %v188 = vunpack.c.h.b16 %v87
  %v189 = vunpack.c.l.b16 %v88
  %v190 = vunpack.c.h.b16 %v88
  %v191 = vunpack.c.l.b16 %v89
  %v192 = vunpack.c.h.b16 %v89
  %v193 = vunpack.c.l.b16 %v90
  %v194 = vunpack.c.h.b16 %v90
  %v195 = vunpack.c.l.b16 %v91
  %v196 = vunpack.c.h.b16 %v91
  %v197 = vunpack.c.l.b16 %v92
  %v198 = vunpack.c.h.b16 %v92
  %v199 = vunpack.c.l.b16 %v93
  %v200 = vunpack.c.h.b16 %v93
  %v201 = vunpack.c.l.b16 %v94
  %v202 = vunpack.c.h.b16 %v94
  %v203 = vunpack.c.l.b16 %v95
  %v204 = vunpack.c.h.b16 %v95
  %v205 = vunpack.c.l.b16 %v96
  %v206 = vunpack.c.h.b16 %v96
  %v207 = vunpack.c.l.b16 %v97
  %v208 = vunpack.c.h.b16 %v97
  %v209 = vunpack.c.l.b16 %v98
  %v210 = vunpack.c.h.b16 %v98
  %v211 = vunpack.c.l.b16 %v99
  %v212 = vunpack.c.h.b16 %v99
  %v213 = vunpack.c.l.b16 %v100
  %v214 = vunpack.c.h.b16 %v100
  %v215 = vunpack.c.l.b16 %v101
  %v216 = vunpack.c.h.b16 %v101
  %v217 = vunpack.c.l.b16 %v102
  %v218 = vunpack.c.h.b16 %v102
  %v219 = vunpack.c.l.b16 %v103
  %v220 = vunpack.c.h.b16 %v103
  %v221 = vunpack.c.l.b16 %v104
  %v222 = vunpack.c.h.b16 %v104
  %v223 = vunpack.c.l.b16 %v105
  %v224 = vunpack.c.h.b16 %v105
  %v225 = vunpack.c.l.b16 %v106
  %v226 = vunpack.c.h.b16 %v106
  %v227 = vunpack.c.l.b16 %v107
  %v228 = vunpack.c.h.b16 %v107
  %v229 = vunpack.c.l.b16 %v108
  %v230 = vunpack.c.h.b16 %v108
  %v231 = vunpack.c.l.b16 %v109
  %v232 = vunpack.c.h.b16 %v109
  %v233 = vunpack.c.l.b16 %v110
  %v234 = vunpack.c.h.b16 %v110
  %v235 = vunpack.c.l.b16 %v111
  %v236 = vunpack.c.h.b16 %v111
  %v237 = vunpack.c.l.b16 %v112
  %v238 = vunpack.c.h.b16 %v112
  %v239 = vunpack.c.l.b16 %v113
  %v240 = vunpack.c.h.b16 %v113
  %v241 = vunpack.c.l.b16 %v114
  %v242 = vunpack.c.h.b16 %v114
  %v243 = vpack.c.b16 %v181, %v179
  %v244 = vpack.c.b16 %v182, %v180
  %v245 = vpack.c.b16 %v185, %v183
  %v246 = vpack.c.b16 %v186, %v184
  %v247 = vpack.c.b16 %v189, %v187
  %v248 = vpack.c.b16 %v190, %v188
  %v249 = vpack.c.b16 %v193, %v191
  %v250 = vpack.c.b16 %v194, %v192
  %v251 = vpack.c.b16 %v197, %v195
  %v252 = vpack.c.b16 %v198, %v196
  %v253 = vpack.c.b16 %v201, %v199
  %v254 = vpack.c.b16 %v202, %v200
  %v255 = vpack.c.b16 %v205, %v203
  %v256 = vpack.c.b16 %v206, %v204
  %v257 = vpack.c.b16 %v209, %v207
  %v258 = vpack.c.b16 %v210, %v208
  %v259 = vpack.c.b16 %v213, %v211
  %v260 = vpack.c.b16 %v214, %v212
  %v261 = vpack.c.b16 %v217, %v215
  %v262 = vpack.c.b16 %v218, %v216
  %v263 = vpack.c.b16 %v221, %v219
  %v264 = vpack.c.b16 %v222, %v220
  %v265 = vpack.c.b16 %v225, %v223
  %v266 = vpack.c.b16 %v226, %v224
  %v267 = vpack.c.b16 %v229, %v227
  %v268 = vpack.c.b16 %v230, %v228
  %v269 = vpack.c.b16 %v233, %v231
  %v270 = vpack.c.b16 %v234, %v232
  %v271 = vpack.c.b16 %v237, %v235
  %v272 = vpack.c.b16 %v238, %v236
  %v273 = vpack.c.b16 %v241, %v239
  %v274 = vpack.c.b16 %v242, %v240
  %v339 = vunpack.c.l.b16 %v115
  %v340 = vunpack.c.l.b16 %v116
  %v341 = vunpack.c.l.b16 %v117
  %v342 = vunpack.c.l.b16 %v118
  %v343 = vunpack.c.l.b16 %v119
  %v344 = vunpack.c.l.b16 %v120
  %v345 = vunpack.c.l.b16 %v121
  %v346 = vunpack.c.l.b16 %v122
  %v347 = vunpack.c.l.b16 %v123
  %v348 = vunpack.c.l.b16 %v124
  %v349 = vunpack.c.l.b16 %v125
  %v350 = vunpack.c.l.b16 %v126
  %v351 = vunpack.c.l.b16 %v127
  %v352 = vunpack.c.l.b16 %v128
  %v353 = vunpack.c.l.b16 %v129
  %v354 = vunpack.c.l.b16 %v130
  %v355 = vunpack.c.l.b16 %v131
  %v356 = vunpack.c.l.b16 %v132
  %v357 = vunpack.c.l.b16 %v133
  %v358 = vunpack.c.l.b16 %v134
  %v359 = vunpack.c.l.b16 %v135
  %v360 = vunpack.c.l.b16 %v136
  %v361 = vunpack.c.l.b16 %v137
  %v362 = vunpack.c.l.b16 %v138
  %v363 = vunpack.c.l.b16 %v139
  %v364 = vunpack.c.l.b16 %v140
  %v365 = vunpack.c.l.b16 %v141
  %v366 = vunpack.c.l.b16 %v142
  %v367 = vunpack.c.l.b16 %v143
  %v368 = vunpack.c.l.b16 %v144
  %v369 = vunpack.c.l.b16 %v145
  %v370 = vunpack.c.l.b16 %v146
  %v371 = vpack.c.b16 %v340, %v339
  %v372 = vpack.c.b16 %v342, %v341
  %v373 = vpack.c.b16 %v344, %v343
  %v374 = vpack.c.b16 %v346, %v345
  %v375 = vpack.c.b16 %v348, %v347
  %v376 = vpack.c.b16 %v350, %v349
  %v377 = vpack.c.b16 %v352, %v351
  %v378 = vpack.c.b16 %v354, %v353
  %v379 = vpack.c.b16 %v356, %v355
  %v380 = vpack.c.b16 %v358, %v357
  %v381 = vpack.c.b16 %v360, %v359
  %v382 = vpack.c.b16 %v362, %v361
  %v383 = vpack.c.b16 %v364, %v363
  %v384 = vpack.c.b16 %v366, %v365
  %v385 = vpack.c.b16 %v368, %v367
  %v386 = vpack.c.b16 %v370, %v369
  %403 = vmatprep.subr.bf16.mxu0 0
  %404 = vmatpush1.bf16.msra.mxu0 %v378
  %405 = vmatprep.subr.bf16.mxu0 0
  %406 = vmatpush1.bf16.msra.mxu0 %v377
  %407 = vmatprep.subr.bf16.mxu0 0
  %408 = vmatpush1.bf16.msra.mxu0 %v376
  %409 = vmatprep.subr.bf16.mxu0 0
  %410 = vmatpush1.bf16.msra.mxu0 %v375
  %411 = vmatprep.subr.bf16.mxu0 0
  %412 = vmatpush1.bf16.msra.mxu0 %v374
  %413 = vmatprep.subr.bf16.mxu0 0
  %414 = vmatpush1.bf16.msra.mxu0 %v373
  %415 = vmatprep.subr.bf16.mxu0 0
  %416 = vmatpush1.bf16.msra.mxu0 %v372
  %417 = vmatprep.subr.bf16.mxu0 0
  %418 = vmatpush1.bf16.msra.mxu0 %v371
  %419 = vmatprep.subr.bf16.mxu0 0
  %420 = vmatpush2.bf16.msra.mxu0 %v386
  %421 = vmatprep.subr.bf16.mxu0 0
  %422 = vmatpush2.bf16.msra.mxu0 %v385
  %423 = vmatprep.subr.bf16.mxu0 0
  %424 = vmatpush2.bf16.msra.mxu0 %v384
  %425 = vmatprep.subr.bf16.mxu0 0
  %426 = vmatpush2.bf16.msra.mxu0 %v383
  %427 = vmatprep.subr.bf16.mxu0 0
  %428 = vmatpush2.bf16.msra.mxu0 %v382
  %429 = vmatprep.subr.bf16.mxu0 0
  %430 = vmatpush2.bf16.msra.mxu0 %v381
  %431 = vmatprep.subr.bf16.mxu0 0
  %432 = vmatpush2.bf16.msra.mxu0 %v380
  %433 = vmatprep.subr.bf16.mxu0 0
  %434 = vmatpush2.bf16.msra.mxu0 %v379
  %435 = vmatprep.mubr.bf16.mxu0 %v244
  %436 = vmatmul.mubr.bf16.gmra.mxu0 %v243
  %v437 = vpop.f32.mrf.mxu0
  %v438 = vadd.f32 0.0, %v437
  %v439 = vpop.f32.mrf.mxu0
  %v440 = vpop.f32.mrf.mxu0
  %v441 = vadd.f32 0.0, %v440
  %v442 = vpop.f32.mrf.mxu0
  %443 = vmatprep.mubr.bf16.mxu0 %v246
  %444 = vmatmul.mubr.bf16.gmra.mxu0 %v245
  %v445 = vpop.f32.mrf.mxu0
  %v446 = vadd.f32 0.0, %v445
  %v447 = vpop.f32.mrf.mxu0
  %v448 = vpop.f32.mrf.mxu0
  %v449 = vadd.f32 0.0, %v448
  %v450 = vpop.f32.mrf.mxu0
  %451 = vmatprep.mubr.bf16.mxu0 %v248
  %452 = vmatmul.mubr.bf16.gmra.mxu0 %v247
  %v453 = vpop.f32.mrf.mxu0
  %v454 = vadd.f32 0.0, %v453
  %v455 = vpop.f32.mrf.mxu0
  %v456 = vpop.f32.mrf.mxu0
  %v457 = vadd.f32 0.0, %v456
  %v458 = vpop.f32.mrf.mxu0
  %459 = vmatprep.mubr.bf16.mxu0 %v250
  %460 = vmatmul.mubr.bf16.gmra.mxu0 %v249
  %v461 = vpop.f32.mrf.mxu0
  %v462 = vadd.f32 0.0, %v461
  %v463 = vpop.f32.mrf.mxu0
  %v464 = vpop.f32.mrf.mxu0
  %v465 = vadd.f32 0.0, %v464
  %v466 = vpop.f32.mrf.mxu0
  %467 = vmatprep.mubr.bf16.mxu0 %v252
  %468 = vmatmul.mubr.bf16.gmra.mxu0 %v251
  %v469 = vpop.f32.mrf.mxu0
  %v470 = vadd.f32 0.0, %v469
  %v471 = vpop.f32.mrf.mxu0
  %v472 = vpop.f32.mrf.mxu0
  %v473 = vadd.f32 0.0, %v472
  %v474 = vpop.f32.mrf.mxu0
  %475 = vmatprep.mubr.bf16.mxu0 %v254
  %476 = vmatmul.mubr.bf16.gmra.mxu0 %v253
  %v477 = vpop.f32.mrf.mxu0
  %v478 = vadd.f32 0.0, %v477
  %v479 = vpop.f32.mrf.mxu0
  %v480 = vpop.f32.mrf.mxu0
  %v481 = vadd.f32 0.0, %v480
  %v482 = vpop.f32.mrf.mxu0
  %483 = vmatprep.mubr.bf16.mxu0 %v256
  %484 = vmatmul.mubr.bf16.gmra.mxu0 %v255
  %v485 = vpop.f32.mrf.mxu0
  %v486 = vadd.f32 0.0, %v485
  %v487 = vpop.f32.mrf.mxu0
  %v488 = vpop.f32.mrf.mxu0
  %v489 = vadd.f32 0.0, %v488
  %v490 = vpop.f32.mrf.mxu0
  %491 = vmatprep.mubr.bf16.mxu0 %v258
  %492 = vmatmul.mubr.bf16.gmra.mxu0 %v257
  %v493 = vpop.f32.mrf.mxu0
  %v494 = vadd.f32 0.0, %v493
  %v495 = vpop.f32.mrf.mxu0
  %v496 = vpop.f32.mrf.mxu0
  %v497 = vadd.f32 0.0, %v496
  %v498 = vpop.f32.mrf.mxu0
  %499 = vmatprep.mubr.bf16.mxu0 %v260
  %500 = vmatmul.mubr.bf16.gmra.mxu0 %v259
  %v501 = vpop.f32.mrf.mxu0
  %v502 = vadd.f32 0.0, %v501
  %v503 = vpop.f32.mrf.mxu0
  %v504 = vpop.f32.mrf.mxu0
  %v505 = vadd.f32 0.0, %v504
  %v506 = vpop.f32.mrf.mxu0
  %507 = vmatprep.mubr.bf16.mxu0 %v262
  %508 = vmatmul.mubr.bf16.gmra.mxu0 %v261
  %v509 = vpop.f32.mrf.mxu0
  %v510 = vadd.f32 0.0, %v509
  %v511 = vpop.f32.mrf.mxu0
  %v512 = vpop.f32.mrf.mxu0
  %v513 = vadd.f32 0.0, %v512
  %v514 = vpop.f32.mrf.mxu0
  %515 = vmatprep.mubr.bf16.mxu0 %v264
  %516 = vmatmul.mubr.bf16.gmra.mxu0 %v263
  %v517 = vpop.f32.mrf.mxu0
  %v518 = vadd.f32 0.0, %v517
  %v519 = vpop.f32.mrf.mxu0
  %v520 = vpop.f32.mrf.mxu0
  %v521 = vadd.f32 0.0, %v520
  %v522 = vpop.f32.mrf.mxu0
  %523 = vmatprep.mubr.bf16.mxu0 %v266
  %524 = vmatmul.mubr.bf16.gmra.mxu0 %v265
  %v525 = vpop.f32.mrf.mxu0
  %v526 = vadd.f32 0.0, %v525
  %v527 = vpop.f32.mrf.mxu0
  %v528 = vpop.f32.mrf.mxu0
  %v529 = vadd.f32 0.0, %v528
  %v530 = vpop.f32.mrf.mxu0
  %531 = vmatprep.mubr.bf16.mxu0 %v268
  %532 = vmatmul.mubr.bf16.gmra.mxu0 %v267
  %v533 = vpop.f32.mrf.mxu0
  %v534 = vadd.f32 0.0, %v533
  %v535 = vpop.f32.mrf.mxu0
  %v536 = vpop.f32.mrf.mxu0
  %v537 = vadd.f32 0.0, %v536
  %v538 = vpop.f32.mrf.mxu0
  %539 = vmatprep.mubr.bf16.mxu0 %v270
  %540 = vmatmul.mubr.bf16.gmra.mxu0 %v269
  %v541 = vpop.f32.mrf.mxu0
  %v542 = vadd.f32 0.0, %v541
  %v543 = vpop.f32.mrf.mxu0
  %v544 = vpop.f32.mrf.mxu0
  %v545 = vadd.f32 0.0, %v544
  %v546 = vpop.f32.mrf.mxu0
  %547 = vmatprep.mubr.bf16.mxu0 %v272
  %548 = vmatmul.mubr.bf16.gmra.mxu0 %v271
  %v549 = vpop.f32.mrf.mxu0
  %v550 = vadd.f32 0.0, %v549
  %v551 = vpop.f32.mrf.mxu0
  %v552 = vpop.f32.mrf.mxu0
  %v553 = vadd.f32 0.0, %v552
  %v554 = vpop.f32.mrf.mxu0
  %555 = vmatprep.mubr.bf16.mxu0 %v274
  %556 = vmatmul.mubr.bf16.gmra.mxu0 %v273
  %v557 = vpop.f32.mrf.mxu0
  %v558 = vadd.f32 0.0, %v557
  %v559 = vpop.f32.mrf.mxu0
  %v560 = vpop.f32.mrf.mxu0
  %v561 = vadd.f32 0.0, %v560
  %v562 = vpop.f32.mrf.mxu0
  %563 = vdwg.mxu0
  %v564 = vadd.f32 %v51, %v438
  %v565 = vadd.f32 %v52, %v441
  %v566 = vadd.f32 %v53, %v446
  %v567 = vadd.f32 %v54, %v449
  %v568 = vadd.f32 %v55, %v454
  %v569 = vadd.f32 %v56, %v457
  %v570 = vadd.f32 %v57, %v462
  %v571 = vadd.f32 %v58, %v465
  %v572 = vadd.f32 %v59, %v470
  %v573 = vadd.f32 %v60, %v473
  %v574 = vadd.f32 %v61, %v478
  %v575 = vadd.f32 %v62, %v481
  %v576 = vadd.f32 %v63, %v486
  %v577 = vadd.f32 %v64, %v489
  %v578 = vadd.f32 %v65, %v494
  %v579 = vadd.f32 %v66, %v497
  %v580 = vadd.f32 %v67, %v502
  %v581 = vadd.f32 %v68, %v505
  %v582 = vadd.f32 %v69, %v510
  %v583 = vadd.f32 %v70, %v513
  %v584 = vadd.f32 %v71, %v518
  %v585 = vadd.f32 %v72, %v521
  %v586 = vadd.f32 %v73, %v526
  %v587 = vadd.f32 %v74, %v529
  %v588 = vadd.f32 %v75, %v534
  %v589 = vadd.f32 %v76, %v537
  %v590 = vadd.f32 %v77, %v542
  %v591 = vadd.f32 %v78, %v545
  %v592 = vadd.f32 %v79, %v550
  %v593 = vadd.f32 %v80, %v553
  %v594 = vadd.f32 %v81, %v558
  %v595 = vadd.f32 %v82, %v561
  %596 = vst [vmem:[#allocation2] sm:$0xff] %v564
  %597 = vst [vmem:[#allocation2 + $0x8] sm:$0xff] %v565
  %598 = vst [vmem:[#allocation2 + $0x10] sm:$0xff] %v566
  %599 = vst [vmem:[#allocation2 + $0x18] sm:$0xff] %v567
  %600 = vst [vmem:[#allocation2 + $0x20] sm:$0xff] %v568
  %601 = vst [vmem:[#allocation2 + $0x28] sm:$0xff] %v569
  %602 = vst [vmem:[#allocation2 + $0x30] sm:$0xff] %v570
  %603 = vst [vmem:[#allocation2 + $0x38] sm:$0xff] %v571
  %604 = vst [vmem:[#allocation2 + $0x40] sm:$0xff] %v572
  %605 = vst [vmem:[#allocation2 + $0x48] sm:$0xff] %v573
  %606 = vst [vmem:[#allocation2 + $0x50] sm:$0xff] %v574
  %607 = vst [vmem:[#allocation2 + $0x58] sm:$0xff] %v575
  %608 = vst [vmem:[#allocation2 + $0x60] sm:$0xff] %v576
  %609 = vst [vmem:[#allocation2 + $0x68] sm:$0xff] %v577
  %610 = vst [vmem:[#allocation2 + $0x70] sm:$0xff] %v578
  %611 = vst [vmem:[#allocation2 + $0x78] sm:$0xff] %v579
  %612 = vst [vmem:[#allocation2 + $0x80] sm:$0xff] %v580
  %613 = vst [vmem:[#allocation2 + $0x88] sm:$0xff] %v581
  %614 = vst [vmem:[#allocation2 + $0x90] sm:$0xff] %v582
  %615 = vst [vmem:[#allocation2 + $0x98] sm:$0xff] %v583
  %616 = vst [vmem:[#allocation2 + $0xa0] sm:$0xff] %v584
  %617 = vst [vmem:[#allocation2 + $0xa8] sm:$0xff] %v585
  %618 = vst [vmem:[#allocation2 + $0xb0] sm:$0xff] %v586
  %619 = vst [vmem:[#allocation2 + $0xb8] sm:$0xff] %v587
  %620 = vst [vmem:[#allocation2 + $0xc0] sm:$0xff] %v588
  %621 = vst [vmem:[#allocation2 + $0xc8] sm:$0xff] %v589
  %622 = vst [vmem:[#allocation2 + $0xd0] sm:$0xff] %v590
  %623 = vst [vmem:[#allocation2 + $0xd8] sm:$0xff] %v591
  %624 = vst [vmem:[#allocation2 + $0xe0] sm:$0xff] %v592
  %625 = vst [vmem:[#allocation2 + $0xe8] sm:$0xff] %v593
  %626 = vst [vmem:[#allocation2 + $0xf0] sm:$0xff] %v594
  %627 = vst [vmem:[#allocation2 + $0xf8] sm:$0xff] %v595
  // Predicated region
  $region18: #{_gcn_forward_impl.8} parent=0 // pred_check
    %p628 = pneg %p15
  $region19: #{_gcn_forward_impl.8} parent=0 // pred_check_branch
    %630 = sbr.rel (%p628) target = $region21
  $region20: #{_gcn_forward_impl.8} parent=0 // pred_region
    %v631 = vld [vmem:[#allocation2] sm:$0xff]
    %v632 = vld [vmem:[#allocation2 + $0x8] sm:$0xff]
    %v633 = vld [vmem:[#allocation2 + $0x10] sm:$0xff]
    %v634 = vld [vmem:[#allocation2 + $0x18] sm:$0xff]
    %v635 = vld [vmem:[#allocation2 + $0x20] sm:$0xff]
    %v636 = vld [vmem:[#allocation2 + $0x28] sm:$0xff]
    %v637 = vld [vmem:[#allocation2 + $0x30] sm:$0xff]
    %v638 = vld [vmem:[#allocation2 + $0x38] sm:$0xff]
    %v639 = vld [vmem:[#allocation2 + $0x40] sm:$0xff]
    %v640 = vld [vmem:[#allocation2 + $0x48] sm:$0xff]
    %v641 = vld [vmem:[#allocation2 + $0x50] sm:$0xff]
    %v642 = vld [vmem:[#allocation2 + $0x58] sm:$0xff]
    %v643 = vld [vmem:[#allocation2 + $0x60] sm:$0xff]
    %v644 = vld [vmem:[#allocation2 + $0x68] sm:$0xff]
    %v645 = vld [vmem:[#allocation2 + $0x70] sm:$0xff]
    %v646 = vld [vmem:[#allocation2 + $0x78] sm:$0xff]
    %v647 = vld [vmem:[#allocation2 + $0x80] sm:$0xff]
    %v648 = vld [vmem:[#allocation2 + $0x88] sm:$0xff]
    %v649 = vld [vmem:[#allocation2 + $0x90] sm:$0xff]
    %v650 = vld [vmem:[#allocation2 + $0x98] sm:$0xff]
    %v651 = vld [vmem:[#allocation2 + $0xa0] sm:$0xff]
    %v652 = vld [vmem:[#allocation2 + $0xa8] sm:$0xff]
    %v653 = vld [vmem:[#allocation2 + $0xb0] sm:$0xff]
    %v654 = vld [vmem:[#allocation2 + $0xb8] sm:$0xff]
    %v655 = vld [vmem:[#allocation2 + $0xc0] sm:$0xff]
    %v656 = vld [vmem:[#allocation2 + $0xc8] sm:$0xff]
    %v657 = vld [vmem:[#allocation2 + $0xd0] sm:$0xff]
    %v658 = vld [vmem:[#allocation2 + $0xd8] sm:$0xff]
    %v659 = vld [vmem:[#allocation2 + $0xe0] sm:$0xff]
    %v660 = vld [vmem:[#allocation2 + $0xe8] sm:$0xff]
    %v661 = vld [vmem:[#allocation2 + $0xf0] sm:$0xff]
    %v662 = vld [vmem:[#allocation2 + $0xf8] sm:$0xff]
    %v663 = vld [vmem:[%s2] sm:$0x1]
    %v665 = vlaneseq
    %v666 = vshrl.u32 %v665, 7
    %v667 = vsub.s32 0, %v666
    %v668 = vrot.slane %v663, %v667
    %v670 = vadd.f32 %v631, %v668
    %v671 = vadd.f32 %v632, %v668
    %v672 = vadd.f32 %v633, %v668
    %v673 = vadd.f32 %v634, %v668
    %v674 = vadd.f32 %v635, %v668
    %v675 = vadd.f32 %v636, %v668
    %v676 = vadd.f32 %v637, %v668
    %v677 = vadd.f32 %v638, %v668
    %v678 = vadd.f32 %v639, %v668
    %v679 = vadd.f32 %v640, %v668
    %v680 = vadd.f32 %v641, %v668
    %v681 = vadd.f32 %v642, %v668
    %v682 = vadd.f32 %v643, %v668
    %v683 = vadd.f32 %v644, %v668
    %v684 = vadd.f32 %v645, %v668
    %v685 = vadd.f32 %v646, %v668
    %v686 = vadd.f32 %v647, %v668
    %v687 = vadd.f32 %v648, %v668
    %v688 = vadd.f32 %v649, %v668
    %v689 = vadd.f32 %v650, %v668
    %v690 = vadd.f32 %v651, %v668
    %v691 = vadd.f32 %v652, %v668
    %v692 = vadd.f32 %v653, %v668
    %v693 = vadd.f32 %v654, %v668
    %v694 = vadd.f32 %v655, %v668
    %v695 = vadd.f32 %v656, %v668
    %v696 = vadd.f32 %v657, %v668
    %v697 = vadd.f32 %v658, %v668
    %v698 = vadd.f32 %v659, %v668
    %v699 = vadd.f32 %v660, %v668
    %v700 = vadd.f32 %v661, %v668
    %v701 = vadd.f32 %v662, %v668
    %702 = vst [vmem:[%s3] sm:$0xff] %v670
    %703 = vst [vmem:[%s3 + $0x8] sm:$0xff] %v671
    %704 = vst [vmem:[%s3 + $0x10] sm:$0xff] %v672
    %705 = vst [vmem:[%s3 + $0x18] sm:$0xff] %v673
    %706 = vst [vmem:[%s3 + $0x20] sm:$0xff] %v674
    %707 = vst [vmem:[%s3 + $0x28] sm:$0xff] %v675
    %708 = vst [vmem:[%s3 + $0x30] sm:$0xff] %v676
    %709 = vst [vmem:[%s3 + $0x38] sm:$0xff] %v677
    %710 = vst [vmem:[%s3 + $0x40] sm:$0xff] %v678
    %711 = vst [vmem:[%s3 + $0x48] sm:$0xff] %v679
    %712 = vst [vmem:[%s3 + $0x50] sm:$0xff] %v680
    %713 = vst [vmem:[%s3 + $0x58] sm:$0xff] %v681
    %714 = vst [vmem:[%s3 + $0x60] sm:$0xff] %v682
    %715 = vst [vmem:[%s3 + $0x68] sm:$0xff] %v683
    %716 = vst [vmem:[%s3 + $0x70] sm:$0xff] %v684
    %717 = vst [vmem:[%s3 + $0x78] sm:$0xff] %v685
    %718 = vst [vmem:[%s3 + $0x80] sm:$0xff] %v686
    %719 = vst [vmem:[%s3 + $0x88] sm:$0xff] %v687
    %720 = vst [vmem:[%s3 + $0x90] sm:$0xff] %v688
    %721 = vst [vmem:[%s3 + $0x98] sm:$0xff] %v689
    %722 = vst [vmem:[%s3 + $0xa0] sm:$0xff] %v690
    %723 = vst [vmem:[%s3 + $0xa8] sm:$0xff] %v691
    %724 = vst [vmem:[%s3 + $0xb0] sm:$0xff] %v692
    %725 = vst [vmem:[%s3 + $0xb8] sm:$0xff] %v693
    %726 = vst [vmem:[%s3 + $0xc0] sm:$0xff] %v694
    %727 = vst [vmem:[%s3 + $0xc8] sm:$0xff] %v695
    %728 = vst [vmem:[%s3 + $0xd0] sm:$0xff] %v696
    %729 = vst [vmem:[%s3 + $0xd8] sm:$0xff] %v697
    %730 = vst [vmem:[%s3 + $0xe0] sm:$0xff] %v698
    %731 = vst [vmem:[%s3 + $0xe8] sm:$0xff] %v699
    %732 = vst [vmem:[%s3 + $0xf0] sm:$0xff] %v700
    %733 = vst [vmem:[%s3 + $0xf8] sm:$0xff] %v701
  $region21: #{_gcn_forward_impl.8} parent=0 // pred_fallthru
    _
  // Predicated region
  $region22: #{_gcn_forward_impl.8} parent=0 // pred_check
    _
  $region23: #{_gcn_forward_impl.8} parent=0 // pred_check_branch
    %735 = sbr.rel (0) target = $region25
  $region24: #{_gcn_forward_impl.8} parent=0 // pred_region
    _
  $region25: #{_gcn_forward_impl.8} parent=0 // pred_fallthru
    _
  // Predicated region
  $region26: #{_gcn_forward_impl.8} parent=0 // pred_check
    _
  $region27: #{_gcn_forward_impl.8} parent=0 // pred_check_branch
    %737 = sbr.rel (0) target = $region29
  $region28: #{_gcn_forward_impl.8} parent=0 // pred_region
    _
  $region29: #{_gcn_forward_impl.8} parent=0 // pred_fallthru
    _

// kernel: _gcn_forward_impl.6
$region0: #{_gcn_forward_impl.6}
  #allocation0 [shape = 'u32[]', space=smem, size = 0x4, offset = 0x4, fixed_abs, tag = 'smem constant byte address 0x4 - core index']
  #allocation1 [shape = 'u32[144,128]{1,0:T(1,128)}', space=vmem, size = 0x12000, scoped, tag = 'internal scratch']
  #allocation2 [shape = 'f32[256,128]{1,0:T(8,128)}', space=vmem, size = 0x20000, scoped, tag = 'scratch operand']
  %s0 = inlined_call_operand.vmem [shape: bf16[256,256], index: 0, kind: input, shape index: {}]
  %s1 = inlined_call_operand.vmem [shape: bf16[256,128], index: 1, kind: input, shape index: {}]
  %s2 = inlined_call_operand.vmem [shape: f32[1,128], index: 2, kind: input, shape index: {}]
  %s3 = inlined_call_operand.vmem [shape: bf16[256,128], index: 3, kind: output, shape index: {}]
  %s4 = sld [smem:[#allocation0]]
  $region30: #{_gcn_forward_impl.6} parent=0
    _
  %s6 = ssub.s32 1, %s4
  %s7 = scalar_select 0, %s6, %s4
  // Predicated region
  $region2: #{_gcn_forward_impl.6} parent=0 // pred_check
    _
  $region3: #{_gcn_forward_impl.6} parent=0 // pred_check_branch
    %9 = sbr.rel (0) target = $region5
  $region4: #{_gcn_forward_impl.6} parent=0 // pred_region
    _
  $region5: #{_gcn_forward_impl.6} parent=0 // pred_fallthru
    _
  // Predicated region
  $region6: #{_gcn_forward_impl.6} parent=0 // pred_check
    _
  $region7: #{_gcn_forward_impl.6} parent=0 // pred_check_branch
    %11 = sbr.rel (0) target = $region9
  $region8: #{_gcn_forward_impl.6} parent=0 // pred_region
    _
  $region9: #{_gcn_forward_impl.6} parent=0 // pred_fallthru
    _
  // Predicated region
  $region10: #{_gcn_forward_impl.6} parent=0 // pred_check
    _
  $region11: #{_gcn_forward_impl.6} parent=0 // pred_check_branch
    %13 = sbr.rel (0) target = $region13
  $region12: #{_gcn_forward_impl.6} parent=0 // pred_region
    _
  $region13: #{_gcn_forward_impl.6} parent=0 // pred_fallthru
    _
  %p15 = scmp.eq.s32.totalorder 0, 0
  // Predicated region
  $region14: #{_gcn_forward_impl.6} parent=0 // pred_check
    %p16 = pneg %p15
  $region15: #{_gcn_forward_impl.6} parent=0 // pred_check_branch
    %18 = sbr.rel (%p16) target = $region17
  $region16: #{_gcn_forward_impl.6} parent=0 // pred_region
    %19 = vst [vmem:[#allocation2] sm:$0xff] 0.0
    %20 = vst [vmem:[#allocation2 + $0x8] sm:$0xff] 0.0
    %21 = vst [vmem:[#allocation2 + $0x10] sm:$0xff] 0.0
    %22 = vst [vmem:[#allocation2 + $0x18] sm:$0xff] 0.0
    %23 = vst [vmem:[#allocation2 + $0x20] sm:$0xff] 0.0
    %24 = vst [vmem:[#allocation2 + $0x28] sm:$0xff] 0.0
    %25 = vst [vmem:[#allocation2 + $0x30] sm:$0xff] 0.0
    %26 = vst [vmem:[#allocation2 + $0x38] sm:$0xff] 0.0
    %27 = vst [vmem:[#allocation2 + $0x40] sm:$0xff] 0.0
    %28 = vst [vmem:[#allocation2 + $0x48] sm:$0xff] 0.0
    %29 = vst [vmem:[#allocation2 + $0x50] sm:$0xff] 0.0
    %30 = vst [vmem:[#allocation2 + $0x58] sm:$0xff] 0.0
    %31 = vst [vmem:[#allocation2 + $0x60] sm:$0xff] 0.0
    %32 = vst [vmem:[#allocation2 + $0x68] sm:$0xff] 0.0
    %33 = vst [vmem:[#allocation2 + $0x70] sm:$0xff] 0.0
    %34 = vst [vmem:[#allocation2 + $0x78] sm:$0xff] 0.0
    %35 = vst [vmem:[#allocation2 + $0x80] sm:$0xff] 0.0
    %36 = vst [vmem:[#allocation2 + $0x88] sm:$0xff] 0.0
    %37 = vst [vmem:[#allocation2 + $0x90] sm:$0xff] 0.0
    %38 = vst [vmem:[#allocation2 + $0x98] sm:$0xff] 0.0
    %39 = vst [vmem:[#allocation2 + $0xa0] sm:$0xff] 0.0
    %40 = vst [vmem:[#allocation2 + $0xa8] sm:$0xff] 0.0
    %41 = vst [vmem:[#allocation2 + $0xb0] sm:$0xff] 0.0
    %42 = vst [vmem:[#allocation2 + $0xb8] sm:$0xff] 0.0
    %43 = vst [vmem:[#allocation2 + $0xc0] sm:$0xff] 0.0
    %44 = vst [vmem:[#allocation2 + $0xc8] sm:$0xff] 0.0
    %45 = vst [vmem:[#allocation2 + $0xd0] sm:$0xff] 0.0
    %46 = vst [vmem:[#allocation2 + $0xd8] sm:$0xff] 0.0
    %47 = vst [vmem:[#allocation2 + $0xe0] sm:$0xff] 0.0
    %48 = vst [vmem:[#allocation2 + $0xe8] sm:$0xff] 0.0
    %49 = vst [vmem:[#allocation2 + $0xf0] sm:$0xff] 0.0
    %50 = vst [vmem:[#allocation2 + $0xf8] sm:$0xff] 0.0
  $region17: #{_gcn_forward_impl.6} parent=0 // pred_fallthru
    _
  %v51 = vld [vmem:[#allocation2] sm:$0xff]
  %v52 = vld [vmem:[#allocation2 + $0x8] sm:$0xff]
  %v53 = vld [vmem:[#allocation2 + $0x10] sm:$0xff]
  %v54 = vld [vmem:[#allocation2 + $0x18] sm:$0xff]
  %v55 = vld [vmem:[#allocation2 + $0x20] sm:$0xff]
  %v56 = vld [vmem:[#allocation2 + $0x28] sm:$0xff]
  %v57 = vld [vmem:[#allocation2 + $0x30] sm:$0xff]
  %v58 = vld [vmem:[#allocation2 + $0x38] sm:$0xff]
  %v59 = vld [vmem:[#allocation2 + $0x40] sm:$0xff]
  %v60 = vld [vmem:[#allocation2 + $0x48] sm:$0xff]
  %v61 = vld [vmem:[#allocation2 + $0x50] sm:$0xff]
  %v62 = vld [vmem:[#allocation2 + $0x58] sm:$0xff]
  %v63 = vld [vmem:[#allocation2 + $0x60] sm:$0xff]
  %v64 = vld [vmem:[#allocation2 + $0x68] sm:$0xff]
  %v65 = vld [vmem:[#allocation2 + $0x70] sm:$0xff]
  %v66 = vld [vmem:[#allocation2 + $0x78] sm:$0xff]
  %v67 = vld [vmem:[#allocation2 + $0x80] sm:$0xff]
  %v68 = vld [vmem:[#allocation2 + $0x88] sm:$0xff]
  %v69 = vld [vmem:[#allocation2 + $0x90] sm:$0xff]
  %v70 = vld [vmem:[#allocation2 + $0x98] sm:$0xff]
  %v71 = vld [vmem:[#allocation2 + $0xa0] sm:$0xff]
  %v72 = vld [vmem:[#allocation2 + $0xa8] sm:$0xff]
  %v73 = vld [vmem:[#allocation2 + $0xb0] sm:$0xff]
  %v74 = vld [vmem:[#allocation2 + $0xb8] sm:$0xff]
  %v75 = vld [vmem:[#allocation2 + $0xc0] sm:$0xff]
  %v76 = vld [vmem:[#allocation2 + $0xc8] sm:$0xff]
  %v77 = vld [vmem:[#allocation2 + $0xd0] sm:$0xff]
  %v78 = vld [vmem:[#allocation2 + $0xd8] sm:$0xff]
  %v79 = vld [vmem:[#allocation2 + $0xe0] sm:$0xff]
  %v80 = vld [vmem:[#allocation2 + $0xe8] sm:$0xff]
  %v81 = vld [vmem:[#allocation2 + $0xf0] sm:$0xff]
  %v82 = vld [vmem:[#allocation2 + $0xf8] sm:$0xff]
  %v83 = vld [vmem:[%s0] sm:$0xff]
  %v84 = vld [vmem:[%s0 + $0x8] sm:$0xff]
  %v85 = vld [vmem:[%s0 + $0x10] sm:$0xff]
  %v86 = vld [vmem:[%s0 + $0x18] sm:$0xff]
  %v87 = vld [vmem:[%s0 + $0x20] sm:$0xff]
  %v88 = vld [vmem:[%s0 + $0x28] sm:$0xff]
  %v89 = vld [vmem:[%s0 + $0x30] sm:$0xff]
  %v90 = vld [vmem:[%s0 + $0x38] sm:$0xff]
  %v91 = vld [vmem:[%s0 + $0x40] sm:$0xff]
  %v92 = vld [vmem:[%s0 + $0x48] sm:$0xff]
  %v93 = vld [vmem:[%s0 + $0x50] sm:$0xff]
  %v94 = vld [vmem:[%s0 + $0x58] sm:$0xff]
  %v95 = vld [vmem:[%s0 + $0x60] sm:$0xff]
  %v96 = vld [vmem:[%s0 + $0x68] sm:$0xff]
  %v97 = vld [vmem:[%s0 + $0x70] sm:$0xff]
  %v98 = vld [vmem:[%s0 + $0x78] sm:$0xff]
  %v99 = vld [vmem:[%s0 + $0x80] sm:$0xff]
  %v100 = vld [vmem:[%s0 + $0x88] sm:$0xff]
  %v101 = vld [vmem:[%s0 + $0x90] sm:$0xff]
  %v102 = vld [vmem:[%s0 + $0x98] sm:$0xff]
  %v103 = vld [vmem:[%s0 + $0xa0] sm:$0xff]
  %v104 = vld [vmem:[%s0 + $0xa8] sm:$0xff]
  %v105 = vld [vmem:[%s0 + $0xb0] sm:$0xff]
  %v106 = vld [vmem:[%s0 + $0xb8] sm:$0xff]
  %v107 = vld [vmem:[%s0 + $0xc0] sm:$0xff]
  %v108 = vld [vmem:[%s0 + $0xc8] sm:$0xff]
  %v109 = vld [vmem:[%s0 + $0xd0] sm:$0xff]
  %v110 = vld [vmem:[%s0 + $0xd8] sm:$0xff]
  %v111 = vld [vmem:[%s0 + $0xe0] sm:$0xff]
  %v112 = vld [vmem:[%s0 + $0xe8] sm:$0xff]
  %v113 = vld [vmem:[%s0 + $0xf0] sm:$0xff]
  %v114 = vld [vmem:[%s0 + $0xf8] sm:$0xff]
  %v115 = vld [vmem:[%s1] sm:$0xf]
  %v116 = vld [vmem:[%s1 + $0x4] sm:$0xf]
  %v117 = vld [vmem:[%s1 + $0x8] sm:$0xf]
  %v118 = vld [vmem:[%s1 + $0xc] sm:$0xf]
  %v119 = vld [vmem:[%s1 + $0x10] sm:$0xf]
  %v120 = vld [vmem:[%s1 + $0x14] sm:$0xf]
  %v121 = vld [vmem:[%s1 + $0x18] sm:$0xf]
  %v122 = vld [vmem:[%s1 + $0x1c] sm:$0xf]
  %v123 = vld [vmem:[%s1 + $0x20] sm:$0xf]
  %v124 = vld [vmem:[%s1 + $0x24] sm:$0xf]
  %v125 = vld [vmem:[%s1 + $0x28] sm:$0xf]
  %v126 = vld [vmem:[%s1 + $0x2c] sm:$0xf]
  %v127 = vld [vmem:[%s1 + $0x30] sm:$0xf]
  %v128 = vld [vmem:[%s1 + $0x34] sm:$0xf]
  %v129 = vld [vmem:[%s1 + $0x38] sm:$0xf]
  %v130 = vld [vmem:[%s1 + $0x3c] sm:$0xf]
  %v131 = vld [vmem:[%s1 + $0x40] sm:$0xf]
  %v132 = vld [vmem:[%s1 + $0x44] sm:$0xf]
  %v133 = vld [vmem:[%s1 + $0x48] sm:$0xf]
  %v134 = vld [vmem:[%s1 + $0x4c] sm:$0xf]
  %v135 = vld [vmem:[%s1 + $0x50] sm:$0xf]
  %v136 = vld [vmem:[%s1 + $0x54] sm:$0xf]
  %v137 = vld [vmem:[%s1 + $0x58] sm:$0xf]
  %v138 = vld [vmem:[%s1 + $0x5c] sm:$0xf]
  %v139 = vld [vmem:[%s1 + $0x60] sm:$0xf]
  %v140 = vld [vmem:[%s1 + $0x64] sm:$0xf]
  %v141 = vld [vmem:[%s1 + $0x68] sm:$0xf]
  %v142 = vld [vmem:[%s1 + $0x6c] sm:$0xf]
  %v143 = vld [vmem:[%s1 + $0x70] sm:$0xf]
  %v144 = vld [vmem:[%s1 + $0x74] sm:$0xf]
  %v145 = vld [vmem:[%s1 + $0x78] sm:$0xf]
  %v146 = vld [vmem:[%s1 + $0x7c] sm:$0xf]
  %v179 = vunpack.c.l.b16 %v83
  %v180 = vunpack.c.h.b16 %v83
  %v181 = vunpack.c.l.b16 %v84
  %v182 = vunpack.c.h.b16 %v84
  %v183 = vunpack.c.l.b16 %v85
  %v184 = vunpack.c.h.b16 %v85
  %v185 = vunpack.c.l.b16 %v86
  %v186 = vunpack.c.h.b16 %v86
  %v187 = vunpack.c.l.b16 %v87
  %v188 = vunpack.c.h.b16 %v87
  %v189 = vunpack.c.l.b16 %v88
  %v190 = vunpack.c.h.b16 %v88
  %v191 = vunpack.c.l.b16 %v89
  %v192 = vunpack.c.h.b16 %v89
  %v193 = vunpack.c.l.b16 %v90
  %v194 = vunpack.c.h.b16 %v90
  %v195 = vunpack.c.l.b16 %v91
  %v196 = vunpack.c.h.b16 %v91
  %v197 = vunpack.c.l.b16 %v92
  %v198 = vunpack.c.h.b16 %v92
  %v199 = vunpack.c.l.b16 %v93
  %v200 = vunpack.c.h.b16 %v93
  %v201 = vunpack.c.l.b16 %v94
  %v202 = vunpack.c.h.b16 %v94
  %v203 = vunpack.c.l.b16 %v95
  %v204 = vunpack.c.h.b16 %v95
  %v205 = vunpack.c.l.b16 %v96
  %v206 = vunpack.c.h.b16 %v96
  %v207 = vunpack.c.l.b16 %v97
  %v208 = vunpack.c.h.b16 %v97
  %v209 = vunpack.c.l.b16 %v98
  %v210 = vunpack.c.h.b16 %v98
  %v211 = vunpack.c.l.b16 %v99
  %v212 = vunpack.c.h.b16 %v99
  %v213 = vunpack.c.l.b16 %v100
  %v214 = vunpack.c.h.b16 %v100
  %v215 = vunpack.c.l.b16 %v101
  %v216 = vunpack.c.h.b16 %v101
  %v217 = vunpack.c.l.b16 %v102
  %v218 = vunpack.c.h.b16 %v102
  %v219 = vunpack.c.l.b16 %v103
  %v220 = vunpack.c.h.b16 %v103
  %v221 = vunpack.c.l.b16 %v104
  %v222 = vunpack.c.h.b16 %v104
  %v223 = vunpack.c.l.b16 %v105
  %v224 = vunpack.c.h.b16 %v105
  %v225 = vunpack.c.l.b16 %v106
  %v226 = vunpack.c.h.b16 %v106
  %v227 = vunpack.c.l.b16 %v107
  %v228 = vunpack.c.h.b16 %v107
  %v229 = vunpack.c.l.b16 %v108
  %v230 = vunpack.c.h.b16 %v108
  %v231 = vunpack.c.l.b16 %v109
  %v232 = vunpack.c.h.b16 %v109
  %v233 = vunpack.c.l.b16 %v110
  %v234 = vunpack.c.h.b16 %v110
  %v235 = vunpack.c.l.b16 %v111
  %v236 = vunpack.c.h.b16 %v111
  %v237 = vunpack.c.l.b16 %v112
  %v238 = vunpack.c.h.b16 %v112
  %v239 = vunpack.c.l.b16 %v113
  %v240 = vunpack.c.h.b16 %v113
  %v241 = vunpack.c.l.b16 %v114
  %v242 = vunpack.c.h.b16 %v114
  %v243 = vpack.c.b16 %v181, %v179
  %v244 = vpack.c.b16 %v182, %v180
  %v245 = vpack.c.b16 %v185, %v183
  %v246 = vpack.c.b16 %v186, %v184
  %v247 = vpack.c.b16 %v189, %v187
  %v248 = vpack.c.b16 %v190, %v188
  %v249 = vpack.c.b16 %v193, %v191
  %v250 = vpack.c.b16 %v194, %v192
  %v251 = vpack.c.b16 %v197, %v195
  %v252 = vpack.c.b16 %v198, %v196
  %v253 = vpack.c.b16 %v201, %v199
  %v254 = vpack.c.b16 %v202, %v200
  %v255 = vpack.c.b16 %v205, %v203
  %v256 = vpack.c.b16 %v206, %v204
  %v257 = vpack.c.b16 %v209, %v207
  %v258 = vpack.c.b16 %v210, %v208
  %v259 = vpack.c.b16 %v213, %v211
  %v260 = vpack.c.b16 %v214, %v212
  %v261 = vpack.c.b16 %v217, %v215
  %v262 = vpack.c.b16 %v218, %v216
  %v263 = vpack.c.b16 %v221, %v219
  %v264 = vpack.c.b16 %v222, %v220
  %v265 = vpack.c.b16 %v225, %v223
  %v266 = vpack.c.b16 %v226, %v224
  %v267 = vpack.c.b16 %v229, %v227
  %v268 = vpack.c.b16 %v230, %v228
  %v269 = vpack.c.b16 %v233, %v231
  %v270 = vpack.c.b16 %v234, %v232
  %v271 = vpack.c.b16 %v237, %v235
  %v272 = vpack.c.b16 %v238, %v236
  %v273 = vpack.c.b16 %v241, %v239
  %v274 = vpack.c.b16 %v242, %v240
  %v339 = vunpack.c.l.b16 %v115
  %v340 = vunpack.c.l.b16 %v116
  %v341 = vunpack.c.l.b16 %v117
  %v342 = vunpack.c.l.b16 %v118
  %v343 = vunpack.c.l.b16 %v119
  %v344 = vunpack.c.l.b16 %v120
  %v345 = vunpack.c.l.b16 %v121
  %v346 = vunpack.c.l.b16 %v122
  %v347 = vunpack.c.l.b16 %v123
  %v348 = vunpack.c.l.b16 %v124
  %v349 = vunpack.c.l.b16 %v125
  %v350 = vunpack.c.l.b16 %v126
  %v351 = vunpack.c.l.b16 %v127
  %v352 = vunpack.c.l.b16 %v128
  %v353 = vunpack.c.l.b16 %v129
  %v354 = vunpack.c.l.b16 %v130
  %v355 = vunpack.c.l.b16 %v131
  %v356 = vunpack.c.l.b16 %v132
  %v357 = vunpack.c.l.b16 %v133
  %v358 = vunpack.c.l.b16 %v134
  %v359 = vunpack.c.l.b16 %v135
  %v360 = vunpack.c.l.b16 %v136
  %v361 = vunpack.c.l.b16 %v137
  %v362 = vunpack.c.l.b16 %v138
  %v363 = vunpack.c.l.b16 %v139
  %v364 = vunpack.c.l.b16 %v140
  %v365 = vunpack.c.l.b16 %v141
  %v366 = vunpack.c.l.b16 %v142
  %v367 = vunpack.c.l.b16 %v143
  %v368 = vunpack.c.l.b16 %v144
  %v369 = vunpack.c.l.b16 %v145
  %v370 = vunpack.c.l.b16 %v146
  %v371 = vpack.c.b16 %v340, %v339
  %v372 = vpack.c.b16 %v342, %v341
  %v373 = vpack.c.b16 %v344, %v343
  %v374 = vpack.c.b16 %v346, %v345
  %v375 = vpack.c.b16 %v348, %v347
  %v376 = vpack.c.b16 %v350, %v349
  %v377 = vpack.c.b16 %v352, %v351
  %v378 = vpack.c.b16 %v354, %v353
  %v379 = vpack.c.b16 %v356, %v355
  %v380 = vpack.c.b16 %v358, %v357
  %v381 = vpack.c.b16 %v360, %v359
  %v382 = vpack.c.b16 %v362, %v361
  %v383 = vpack.c.b16 %v364, %v363
  %v384 = vpack.c.b16 %v366, %v365
  %v385 = vpack.c.b16 %v368, %v367
  %v386 = vpack.c.b16 %v370, %v369
  %403 = vmatprep.subr.bf16.mxu0 0
  %404 = vmatpush1.bf16.msra.mxu0 %v378
  %405 = vmatprep.subr.bf16.mxu0 0
  %406 = vmatpush1.bf16.msra.mxu0 %v377
  %407 = vmatprep.subr.bf16.mxu0 0
  %408 = vmatpush1.bf16.msra.mxu0 %v376
  %409 = vmatprep.subr.bf16.mxu0 0
  %410 = vmatpush1.bf16.msra.mxu0 %v375
  %411 = vmatprep.subr.bf16.mxu0 0
  %412 = vmatpush1.bf16.msra.mxu0 %v374
  %413 = vmatprep.subr.bf16.mxu0 0
  %414 = vmatpush1.bf16.msra.mxu0 %v373
  %415 = vmatprep.subr.bf16.mxu0 0
  %416 = vmatpush1.bf16.msra.mxu0 %v372
  %417 = vmatprep.subr.bf16.mxu0 0
  %418 = vmatpush1.bf16.msra.mxu0 %v371
  %419 = vmatprep.subr.bf16.mxu0 0
  %420 = vmatpush2.bf16.msra.mxu0 %v386
  %421 = vmatprep.subr.bf16.mxu0 0
  %422 = vmatpush2.bf16.msra.mxu0 %v385
  %423 = vmatprep.subr.bf16.mxu0 0
  %424 = vmatpush2.bf16.msra.mxu0 %v384
  %425 = vmatprep.subr.bf16.mxu0 0
  %426 = vmatpush2.bf16.msra.mxu0 %v383
  %427 = vmatprep.subr.bf16.mxu0 0
  %428 = vmatpush2.bf16.msra.mxu0 %v382
  %429 = vmatprep.subr.bf16.mxu0 0
  %430 = vmatpush2.bf16.msra.mxu0 %v381
  %431 = vmatprep.subr.bf16.mxu0 0
  %432 = vmatpush2.bf16.msra.mxu0 %v380
  %433 = vmatprep.subr.bf16.mxu0 0
  %434 = vmatpush2.bf16.msra.mxu0 %v379
  %435 = vmatprep.mubr.bf16.mxu0 %v244
  %436 = vmatmul.mubr.bf16.gmra.mxu0 %v243
  %v437 = vpop.f32.mrf.mxu0
  %v438 = vadd.f32 0.0, %v437
  %v439 = vpop.f32.mrf.mxu0
  %v440 = vpop.f32.mrf.mxu0
  %v441 = vadd.f32 0.0, %v440
  %v442 = vpop.f32.mrf.mxu0
  %443 = vmatprep.mubr.bf16.mxu0 %v246
  %444 = vmatmul.mubr.bf16.gmra.mxu0 %v245
  %v445 = vpop.f32.mrf.mxu0
  %v446 = vadd.f32 0.0, %v445
  %v447 = vpop.f32.mrf.mxu0
  %v448 = vpop.f32.mrf.mxu0
  %v449 = vadd.f32 0.0, %v448
  %v450 = vpop.f32.mrf.mxu0
  %451 = vmatprep.mubr.bf16.mxu0 %v248
  %452 = vmatmul.mubr.bf16.gmra.mxu0 %v247
  %v453 = vpop.f32.mrf.mxu0
  %v454 = vadd.f32 0.0, %v453
  %v455 = vpop.f32.mrf.mxu0
  %v456 = vpop.f32.mrf.mxu0
  %v457 = vadd.f32 0.0, %v456
  %v458 = vpop.f32.mrf.mxu0
  %459 = vmatprep.mubr.bf16.mxu0 %v250
  %460 = vmatmul.mubr.bf16.gmra.mxu0 %v249
  %v461 = vpop.f32.mrf.mxu0
  %v462 = vadd.f32 0.0, %v461
  %v463 = vpop.f32.mrf.mxu0
  %v464 = vpop.f32.mrf.mxu0
  %v465 = vadd.f32 0.0, %v464
  %v466 = vpop.f32.mrf.mxu0
  %467 = vmatprep.mubr.bf16.mxu0 %v252
  %468 = vmatmul.mubr.bf16.gmra.mxu0 %v251
  %v469 = vpop.f32.mrf.mxu0
  %v470 = vadd.f32 0.0, %v469
  %v471 = vpop.f32.mrf.mxu0
  %v472 = vpop.f32.mrf.mxu0
  %v473 = vadd.f32 0.0, %v472
  %v474 = vpop.f32.mrf.mxu0
  %475 = vmatprep.mubr.bf16.mxu0 %v254
  %476 = vmatmul.mubr.bf16.gmra.mxu0 %v253
  %v477 = vpop.f32.mrf.mxu0
  %v478 = vadd.f32 0.0, %v477
  %v479 = vpop.f32.mrf.mxu0
  %v480 = vpop.f32.mrf.mxu0
  %v481 = vadd.f32 0.0, %v480
  %v482 = vpop.f32.mrf.mxu0
  %483 = vmatprep.mubr.bf16.mxu0 %v256
  %484 = vmatmul.mubr.bf16.gmra.mxu0 %v255
  %v485 = vpop.f32.mrf.mxu0
  %v486 = vadd.f32 0.0, %v485
  %v487 = vpop.f32.mrf.mxu0
  %v488 = vpop.f32.mrf.mxu0
  %v489 = vadd.f32 0.0, %v488
  %v490 = vpop.f32.mrf.mxu0
  %491 = vmatprep.mubr.bf16.mxu0 %v258
  %492 = vmatmul.mubr.bf16.gmra.mxu0 %v257
  %v493 = vpop.f32.mrf.mxu0
  %v494 = vadd.f32 0.0, %v493
  %v495 = vpop.f32.mrf.mxu0
  %v496 = vpop.f32.mrf.mxu0
  %v497 = vadd.f32 0.0, %v496
  %v498 = vpop.f32.mrf.mxu0
  %499 = vmatprep.mubr.bf16.mxu0 %v260
  %500 = vmatmul.mubr.bf16.gmra.mxu0 %v259
  %v501 = vpop.f32.mrf.mxu0
  %v502 = vadd.f32 0.0, %v501
  %v503 = vpop.f32.mrf.mxu0
  %v504 = vpop.f32.mrf.mxu0
  %v505 = vadd.f32 0.0, %v504
  %v506 = vpop.f32.mrf.mxu0
  %507 = vmatprep.mubr.bf16.mxu0 %v262
  %508 = vmatmul.mubr.bf16.gmra.mxu0 %v261
  %v509 = vpop.f32.mrf.mxu0
  %v510 = vadd.f32 0.0, %v509
  %v511 = vpop.f32.mrf.mxu0
  %v512 = vpop.f32.mrf.mxu0
  %v513 = vadd.f32 0.0, %v512
  %v514 = vpop.f32.mrf.mxu0
  %515 = vmatprep.mubr.bf16.mxu0 %v264
  %516 = vmatmul.mubr.bf16.gmra.mxu0 %v263
  %v517 = vpop.f32.mrf.mxu0
  %v518 = vadd.f32 0.0, %v517
  %v519 = vpop.f32.mrf.mxu0
  %v520 = vpop.f32.mrf.mxu0
  %v521 = vadd.f32 0.0, %v520
  %v522 = vpop.f32.mrf.mxu0
  %523 = vmatprep.mubr.bf16.mxu0 %v266
  %524 = vmatmul.mubr.bf16.gmra.mxu0 %v265
  %v525 = vpop.f32.mrf.mxu0
  %v526 = vadd.f32 0.0, %v525
  %v527 = vpop.f32.mrf.mxu0
  %v528 = vpop.f32.mrf.mxu0
  %v529 = vadd.f32 0.0, %v528
  %v530 = vpop.f32.mrf.mxu0
  %531 = vmatprep.mubr.bf16.mxu0 %v268
  %532 = vmatmul.mubr.bf16.gmra.mxu0 %v267
  %v533 = vpop.f32.mrf.mxu0
  %v534 = vadd.f32 0.0, %v533
  %v535 = vpop.f32.mrf.mxu0
  %v536 = vpop.f32.mrf.mxu0
  %v537 = vadd.f32 0.0, %v536
  %v538 = vpop.f32.mrf.mxu0
  %539 = vmatprep.mubr.bf16.mxu0 %v270
  %540 = vmatmul.mubr.bf16.gmra.mxu0 %v269
  %v541 = vpop.f32.mrf.mxu0
  %v542 = vadd.f32 0.0, %v541
  %v543 = vpop.f32.mrf.mxu0
  %v544 = vpop.f32.mrf.mxu0
  %v545 = vadd.f32 0.0, %v544
  %v546 = vpop.f32.mrf.mxu0
  %547 = vmatprep.mubr.bf16.mxu0 %v272
  %548 = vmatmul.mubr.bf16.gmra.mxu0 %v271
  %v549 = vpop.f32.mrf.mxu0
  %v550 = vadd.f32 0.0, %v549
  %v551 = vpop.f32.mrf.mxu0
  %v552 = vpop.f32.mrf.mxu0
  %v553 = vadd.f32 0.0, %v552
  %v554 = vpop.f32.mrf.mxu0
  %555 = vmatprep.mubr.bf16.mxu0 %v274
  %556 = vmatmul.mubr.bf16.gmra.mxu0 %v273
  %v557 = vpop.f32.mrf.mxu0
  %v558 = vadd.f32 0.0, %v557
  %v559 = vpop.f32.mrf.mxu0
  %v560 = vpop.f32.mrf.mxu0
  %v561 = vadd.f32 0.0, %v560
  %v562 = vpop.f32.mrf.mxu0
  %563 = vdwg.mxu0
  %v564 = vadd.f32 %v51, %v438
  %v565 = vadd.f32 %v52, %v441
  %v566 = vadd.f32 %v53, %v446
  %v567 = vadd.f32 %v54, %v449
  %v568 = vadd.f32 %v55, %v454
  %v569 = vadd.f32 %v56, %v457
  %v570 = vadd.f32 %v57, %v462
  %v571 = vadd.f32 %v58, %v465
  %v572 = vadd.f32 %v59, %v470
  %v573 = vadd.f32 %v60, %v473
  %v574 = vadd.f32 %v61, %v478
  %v575 = vadd.f32 %v62, %v481
  %v576 = vadd.f32 %v63, %v486
  %v577 = vadd.f32 %v64, %v489
  %v578 = vadd.f32 %v65, %v494
  %v579 = vadd.f32 %v66, %v497
  %v580 = vadd.f32 %v67, %v502
  %v581 = vadd.f32 %v68, %v505
  %v582 = vadd.f32 %v69, %v510
  %v583 = vadd.f32 %v70, %v513
  %v584 = vadd.f32 %v71, %v518
  %v585 = vadd.f32 %v72, %v521
  %v586 = vadd.f32 %v73, %v526
  %v587 = vadd.f32 %v74, %v529
  %v588 = vadd.f32 %v75, %v534
  %v589 = vadd.f32 %v76, %v537
  %v590 = vadd.f32 %v77, %v542
  %v591 = vadd.f32 %v78, %v545
  %v592 = vadd.f32 %v79, %v550
  %v593 = vadd.f32 %v80, %v553
  %v594 = vadd.f32 %v81, %v558
  %v595 = vadd.f32 %v82, %v561
  %596 = vst [vmem:[#allocation2] sm:$0xff] %v564
  %597 = vst [vmem:[#allocation2 + $0x8] sm:$0xff] %v565
  %598 = vst [vmem:[#allocation2 + $0x10] sm:$0xff] %v566
  %599 = vst [vmem:[#allocation2 + $0x18] sm:$0xff] %v567
  %600 = vst [vmem:[#allocation2 + $0x20] sm:$0xff] %v568
  %601 = vst [vmem:[#allocation2 + $0x28] sm:$0xff] %v569
  %602 = vst [vmem:[#allocation2 + $0x30] sm:$0xff] %v570
  %603 = vst [vmem:[#allocation2 + $0x38] sm:$0xff] %v571
  %604 = vst [vmem:[#allocation2 + $0x40] sm:$0xff] %v572
  %605 = vst [vmem:[#allocation2 + $0x48] sm:$0xff] %v573
  %606 = vst [vmem:[#allocation2 + $0x50] sm:$0xff] %v574
  %607 = vst [vmem:[#allocation2 + $0x58] sm:$0xff] %v575
  %608 = vst [vmem:[#allocation2 + $0x60] sm:$0xff] %v576
  %609 = vst [vmem:[#allocation2 + $0x68] sm:$0xff] %v577
  %610 = vst [vmem:[#allocation2 + $0x70] sm:$0xff] %v578
  %611 = vst [vmem:[#allocation2 + $0x78] sm:$0xff] %v579
  %612 = vst [vmem:[#allocation2 + $0x80] sm:$0xff] %v580
  %613 = vst [vmem:[#allocation2 + $0x88] sm:$0xff] %v581
  %614 = vst [vmem:[#allocation2 + $0x90] sm:$0xff] %v582
  %615 = vst [vmem:[#allocation2 + $0x98] sm:$0xff] %v583
  %616 = vst [vmem:[#allocation2 + $0xa0] sm:$0xff] %v584
  %617 = vst [vmem:[#allocation2 + $0xa8] sm:$0xff] %v585
  %618 = vst [vmem:[#allocation2 + $0xb0] sm:$0xff] %v586
  %619 = vst [vmem:[#allocation2 + $0xb8] sm:$0xff] %v587
  %620 = vst [vmem:[#allocation2 + $0xc0] sm:$0xff] %v588
  %621 = vst [vmem:[#allocation2 + $0xc8] sm:$0xff] %v589
  %622 = vst [vmem:[#allocation2 + $0xd0] sm:$0xff] %v590
  %623 = vst [vmem:[#allocation2 + $0xd8] sm:$0xff] %v591
  %624 = vst [vmem:[#allocation2 + $0xe0] sm:$0xff] %v592
  %625 = vst [vmem:[#allocation2 + $0xe8] sm:$0xff] %v593
  %626 = vst [vmem:[#allocation2 + $0xf0] sm:$0xff] %v594
  %627 = vst [vmem:[#allocation2 + $0xf8] sm:$0xff] %v595
  // Predicated region
  $region18: #{_gcn_forward_impl.6} parent=0 // pred_check
    %p628 = pneg %p15
  $region19: #{_gcn_forward_impl.6} parent=0 // pred_check_branch
    %630 = sbr.rel (%p628) target = $region21
  $region20: #{_gcn_forward_impl.6} parent=0 // pred_region
    %v631 = vld [vmem:[#allocation2] sm:$0xff]
    %v632 = vld [vmem:[#allocation2 + $0x8] sm:$0xff]
    %v633 = vld [vmem:[#allocation2 + $0x10] sm:$0xff]
    %v634 = vld [vmem:[#allocation2 + $0x18] sm:$0xff]
    %v635 = vld [vmem:[#allocation2 + $0x20] sm:$0xff]
    %v636 = vld [vmem:[#allocation2 + $0x28] sm:$0xff]
    %v637 = vld [vmem:[#allocation2 + $0x30] sm:$0xff]
    %v638 = vld [vmem:[#allocation2 + $0x38] sm:$0xff]
    %v639 = vld [vmem:[#allocation2 + $0x40] sm:$0xff]
    %v640 = vld [vmem:[#allocation2 + $0x48] sm:$0xff]
    %v641 = vld [vmem:[#allocation2 + $0x50] sm:$0xff]
    %v642 = vld [vmem:[#allocation2 + $0x58] sm:$0xff]
    %v643 = vld [vmem:[#allocation2 + $0x60] sm:$0xff]
    %v644 = vld [vmem:[#allocation2 + $0x68] sm:$0xff]
    %v645 = vld [vmem:[#allocation2 + $0x70] sm:$0xff]
    %v646 = vld [vmem:[#allocation2 + $0x78] sm:$0xff]
    %v647 = vld [vmem:[#allocation2 + $0x80] sm:$0xff]
    %v648 = vld [vmem:[#allocation2 + $0x88] sm:$0xff]
    %v649 = vld [vmem:[#allocation2 + $0x90] sm:$0xff]
    %v650 = vld [vmem:[#allocation2 + $0x98] sm:$0xff]
    %v651 = vld [vmem:[#allocation2 + $0xa0] sm:$0xff]
    %v652 = vld [vmem:[#allocation2 + $0xa8] sm:$0xff]
    %v653 = vld [vmem:[#allocation2 + $0xb0] sm:$0xff]
    %v654 = vld [vmem:[#allocation2 + $0xb8] sm:$0xff]
    %v655 = vld [vmem:[#allocation2 + $0xc0] sm:$0xff]
    %v656 = vld [vmem:[#allocation2 + $0xc8] sm:$0xff]
    %v657 = vld [vmem:[#allocation2 + $0xd0] sm:$0xff]
    %v658 = vld [vmem:[#allocation2 + $0xd8] sm:$0xff]
    %v659 = vld [vmem:[#allocation2 + $0xe0] sm:$0xff]
    %v660 = vld [vmem:[#allocation2 + $0xe8] sm:$0xff]
    %v661 = vld [vmem:[#allocation2 + $0xf0] sm:$0xff]
    %v662 = vld [vmem:[#allocation2 + $0xf8] sm:$0xff]
    %v663 = vld [vmem:[%s2] sm:$0x1]
    %v665 = vlaneseq
    %v666 = vshrl.u32 %v665, 7
    %v667 = vsub.s32 0, %v666
    %v668 = vrot.slane %v663, %v667
    %v670 = vadd.f32 %v631, %v668
    %v671 = vadd.f32 %v632, %v668
    %v672 = vadd.f32 %v633, %v668
    %v673 = vadd.f32 %v634, %v668
    %v674 = vadd.f32 %v635, %v668
    %v675 = vadd.f32 %v636, %v668
    %v676 = vadd.f32 %v637, %v668
    %v677 = vadd.f32 %v638, %v668
    %v678 = vadd.f32 %v639, %v668
    %v679 = vadd.f32 %v640, %v668
    %v680 = vadd.f32 %v641, %v668
    %v681 = vadd.f32 %v642, %v668
    %v682 = vadd.f32 %v643, %v668
    %v683 = vadd.f32 %v644, %v668
    %v684 = vadd.f32 %v645, %v668
    %v685 = vadd.f32 %v646, %v668
    %v686 = vadd.f32 %v647, %v668
    %v687 = vadd.f32 %v648, %v668
    %v688 = vadd.f32 %v649, %v668
    %v689 = vadd.f32 %v650, %v668
    %v690 = vadd.f32 %v651, %v668
    %v691 = vadd.f32 %v652, %v668
    %v692 = vadd.f32 %v653, %v668
    %v693 = vadd.f32 %v654, %v668
    %v694 = vadd.f32 %v655, %v668
    %v695 = vadd.f32 %v656, %v668
    %v696 = vadd.f32 %v657, %v668
    %v697 = vadd.f32 %v658, %v668
    %v698 = vadd.f32 %v659, %v668
    %v699 = vadd.f32 %v660, %v668
    %v700 = vadd.f32 %v661, %v668
    %v701 = vadd.f32 %v662, %v668
    %v702 = vmax.f32 %v670, 0.0
    %v703 = vmax.f32 %v671, 0.0
    %v704 = vmax.f32 %v672, 0.0
    %v705 = vmax.f32 %v673, 0.0
    %v706 = vmax.f32 %v674, 0.0
    %v707 = vmax.f32 %v675, 0.0
    %v708 = vmax.f32 %v676, 0.0
    %v709 = vmax.f32 %v677, 0.0
    %v710 = vmax.f32 %v678, 0.0
    %v711 = vmax.f32 %v679, 0.0
    %v712 = vmax.f32 %v680, 0.0
    %v713 = vmax.f32 %v681, 0.0
    %v714 = vmax.f32 %v682, 0.0
    %v715 = vmax.f32 %v683, 0.0
    %v716 = vmax.f32 %v684, 0.0
    %v717 = vmax.f32 %v685, 0.0
    %v718 = vmax.f32 %v686, 0.0
    %v719 = vmax.f32 %v687, 0.0
    %v720 = vmax.f32 %v688, 0.0
    %v721 = vmax.f32 %v689, 0.0
    %v722 = vmax.f32 %v690, 0.0
    %v723 = vmax.f32 %v691, 0.0
    %v724 = vmax.f32 %v692, 0.0
    %v725 = vmax.f32 %v693, 0.0
    %v726 = vmax.f32 %v694, 0.0
    %v727 = vmax.f32 %v695, 0.0
    %v728 = vmax.f32 %v696, 0.0
    %v729 = vmax.f32 %v697, 0.0
    %v730 = vmax.f32 %v698, 0.0
    %v731 = vmax.f32 %v699, 0.0
    %v732 = vmax.f32 %v700, 0.0
    %v733 = vmax.f32 %v701, 0.0
    %v734 = vpack.c.bf16 %v703, %v702
    %v735 = vpack.c.bf16 %v705, %v704
    %v736 = vpack.c.bf16 %v707, %v706
    %v737 = vpack.c.bf16 %v709, %v708
    %v738 = vpack.c.bf16 %v711, %v710
    %v739 = vpack.c.bf16 %v713, %v712
    %v740 = vpack.c.bf16 %v715, %v714
    %v741 = vpack.c.bf16 %v717, %v716
    %v742 = vpack.c.bf16 %v719, %v718
    %v743 = vpack.c.bf16 %v721, %v720
    %v744 = vpack.c.bf16 %v723, %v722
    %v745 = vpack.c.bf16 %v725, %v724
    %v746 = vpack.c.bf16 %v727, %v726
    %v747 = vpack.c.bf16 %v729, %v728
    %v748 = vpack.c.bf16 %v731, %v730
    %v749 = vpack.c.bf16 %v733, %v732
    %v766 = vunpack.c.l.b16 %v734
    %v767 = vunpack.c.h.b16 %v734
    %v768 = vunpack.c.l.b16 %v735
    %v769 = vunpack.c.h.b16 %v735
    %v770 = vunpack.c.l.b16 %v736
    %v771 = vunpack.c.h.b16 %v736
    %v772 = vunpack.c.l.b16 %v737
    %v773 = vunpack.c.h.b16 %v737
    %v774 = vunpack.c.l.b16 %v738
    %v775 = vunpack.c.h.b16 %v738
    %v776 = vunpack.c.l.b16 %v739
    %v777 = vunpack.c.h.b16 %v739
    %v778 = vunpack.c.l.b16 %v740
    %v779 = vunpack.c.h.b16 %v740
    %v780 = vunpack.c.l.b16 %v741
    %v781 = vunpack.c.h.b16 %v741
    %v782 = vunpack.c.l.b16 %v742
    %v783 = vunpack.c.h.b16 %v742
    %v784 = vunpack.c.l.b16 %v743
    %v785 = vunpack.c.h.b16 %v743
    %v786 = vunpack.c.l.b16 %v744
    %v787 = vunpack.c.h.b16 %v744
    %v788 = vunpack.c.l.b16 %v745
    %v789 = vunpack.c.h.b16 %v745
    %v790 = vunpack.c.l.b16 %v746
    %v791 = vunpack.c.h.b16 %v746
    %v792 = vunpack.c.l.b16 %v747
    %v793 = vunpack.c.h.b16 %v747
    %v794 = vunpack.c.l.b16 %v748
    %v795 = vunpack.c.h.b16 %v748
    %v796 = vunpack.c.l.b16 %v749
    %v797 = vunpack.c.h.b16 %v749
    %v798 = vpack.c.b16 %v766, %v766
    %v799 = vpack.c.b16 %v767, %v767
    %v800 = vpack.c.b16 %v768, %v768
    %v801 = vpack.c.b16 %v769, %v769
    %v802 = vpack.c.b16 %v770, %v770
    %v803 = vpack.c.b16 %v771, %v771
    %v804 = vpack.c.b16 %v772, %v772
    %v805 = vpack.c.b16 %v773, %v773
    %v806 = vpack.c.b16 %v774, %v774
    %v807 = vpack.c.b16 %v775, %v775
    %v808 = vpack.c.b16 %v776, %v776
    %v809 = vpack.c.b16 %v777, %v777
    %v810 = vpack.c.b16 %v778, %v778
    %v811 = vpack.c.b16 %v779, %v779
    %v812 = vpack.c.b16 %v780, %v780
    %v813 = vpack.c.b16 %v781, %v781
    %v814 = vpack.c.b16 %v782, %v782
    %v815 = vpack.c.b16 %v783, %v783
    %v816 = vpack.c.b16 %v784, %v784
    %v817 = vpack.c.b16 %v785, %v785
    %v818 = vpack.c.b16 %v786, %v786
    %v819 = vpack.c.b16 %v787, %v787
    %v820 = vpack.c.b16 %v788, %v788
    %v821 = vpack.c.b16 %v789, %v789
    %v822 = vpack.c.b16 %v790, %v790
    %v823 = vpack.c.b16 %v791, %v791
    %v824 = vpack.c.b16 %v792, %v792
    %v825 = vpack.c.b16 %v793, %v793
    %v826 = vpack.c.b16 %v794, %v794
    %v827 = vpack.c.b16 %v795, %v795
    %v828 = vpack.c.b16 %v796, %v796
    %v829 = vpack.c.b16 %v797, %v797
    %862 = vst [vmem:[%s3] sm:$0xf] %v798
    %863 = vst [vmem:[%s3 + $0x4] sm:$0xf] %v799
    %864 = vst [vmem:[%s3 + $0x8] sm:$0xf] %v800
    %865 = vst [vmem:[%s3 + $0xc] sm:$0xf] %v801
    %866 = vst [vmem:[%s3 + $0x10] sm:$0xf] %v802
    %867 = vst [vmem:[%s3 + $0x14] sm:$0xf] %v803
    %868 = vst [vmem:[%s3 + $0x18] sm:$0xf] %v804
    %869 = vst [vmem:[%s3 + $0x1c] sm:$0xf] %v805
    %870 = vst [vmem:[%s3 + $0x20] sm:$0xf] %v806
    %871 = vst [vmem:[%s3 + $0x24] sm:$0xf] %v807
    %872 = vst [vmem:[%s3 + $0x28] sm:$0xf] %v808
    %873 = vst [vmem:[%s3 + $0x2c] sm:$0xf] %v809
    %874 = vst [vmem:[%s3 + $0x30] sm:$0xf] %v810
    %875 = vst [vmem:[%s3 + $0x34] sm:$0xf] %v811
    %876 = vst [vmem:[%s3 + $0x38] sm:$0xf] %v812
    %877 = vst [vmem:[%s3 + $0x3c] sm:$0xf] %v813
    %878 = vst [vmem:[%s3 + $0x40] sm:$0xf] %v814
    %879 = vst [vmem:[%s3 + $0x44] sm:$0xf] %v815
    %880 = vst [vmem:[%s3 + $0x48] sm:$0xf] %v816
    %881 = vst [vmem:[%s3 + $0x4c] sm:$0xf] %v817
    %882 = vst [vmem:[%s3 + $0x50] sm:$0xf] %v818
    %883 = vst [vmem:[%s3 + $0x54] sm:$0xf] %v819
    %884 = vst [vmem:[%s3 + $0x58] sm:$0xf] %v820
    %885 = vst [vmem:[%s3 + $0x5c] sm:$0xf] %v821
    %886 = vst [vmem:[%s3 + $0x60] sm:$0xf] %v822
    %887 = vst [vmem:[%s3 + $0x64] sm:$0xf] %v823
    %888 = vst [vmem:[%s3 + $0x68] sm:$0xf] %v824
    %889 = vst [vmem:[%s3 + $0x6c] sm:$0xf] %v825
    %890 = vst [vmem:[%s3 + $0x70] sm:$0xf] %v826
    %891 = vst [vmem:[%s3 + $0x74] sm:$0xf] %v827
    %892 = vst [vmem:[%s3 + $0x78] sm:$0xf] %v828
    %893 = vst [vmem:[%s3 + $0x7c] sm:$0xf] %v829
  $region21: #{_gcn_forward_impl.6} parent=0 // pred_fallthru
    _
  // Predicated region
  $region22: #{_gcn_forward_impl.6} parent=0 // pred_check
    _
  $region23: #{_gcn_forward_impl.6} parent=0 // pred_check_branch
    %895 = sbr.rel (0) target = $region25
  $region24: #{_gcn_forward_impl.6} parent=0 // pred_region
    _
  $region25: #{_gcn_forward_impl.6} parent=0 // pred_fallthru
    _
  // Predicated region
  $region26: #{_gcn_forward_impl.6} parent=0 // pred_check
    _
  $region27: #{_gcn_forward_impl.6} parent=0 // pred_check_branch
    %897 = sbr.rel (0) target = $region29
  $region28: #{_gcn_forward_impl.6} parent=0 // pred_region
    _
  $region29: #{_gcn_forward_impl.6} parent=0 // pred_fallthru
    _

</llo_original>
